<compile_context>
chip_gen: v5e
topology: v5e:2x2
jax: 0.10.0
libtpu: 0.0.40
codegen_flags: <defaults>
</compile_context>

<pallas_src>
import functools
import math

import jax
import jax.numpy as jnp
from jax.experimental import pallas as pl
from jax.experimental.pallas import tpu as pltpu


# ----------------------------- fused kernel -----------------------------
def _evmp_kernel(v_ref, e_ref, vm_ref, em_ref,
                 vwx_ref, vwh_ref, vbx_ref, vbh_ref,
                 ewx_ref, ewh_ref, ebx_ref, ebh_ref,
                 e_out_ref, v_out_ref,
                 v_h_sc, e_h_sc, e_v_sc, *, n, f):
    """One (batch, layer) grid step of the fused EVMP forward."""
    layer = pl.program_id(1)

    # ---- layer 0: load this batch's state into VMEM scratch ----
    @pl.when(layer == 0)
    def _init():
        v_h_sc[...] = v_ref[0]                    # (N, F)
        e_h_sc[...] = e_ref[0]                    # (N*N, F)
        e_v_sc[...] = jnp.zeros_like(e_v_sc)      # (N, F)

    def gru(x, h, wx, wh, bx, bh):
        # stacked gates: columns [0:F]=r, [F:2F]=z, [2F:3F]=n
        gx = jnp.dot(x, wx, preferred_element_type=jnp.float32) + bx
        gh = jnp.dot(h, wh, preferred_element_type=jnp.float32) + bh
        r = jax.nn.sigmoid(gx[:, :f] + gh[:, :f])
        z = jax.nn.sigmoid(gx[:, f:2 * f] + gh[:, f:2 * f])
        cand = jnp.tanh(gx[:, 2 * f:] + r * gh[:, 2 * f:])
        return (1.0 - z) * cand + z * h

    # ---- vertex GRU: v_h = v_cells[layer](e_v, v_h) ----
    v_h = gru(e_v_sc[...], v_h_sc[...],
              vwx_ref[0], vwh_ref[0], vbx_ref[0], vbh_ref[0])
    v_h_sc[...] = v_h

    # ---- Vpack.unpack + vert_combine == 'prod' ----
    vhm = v_h * vm_ref[0]                         # (N, F) masked vertices
    # v_e row (i*N + j) = vhm[i] * vhm[j]   ('prod' is symmetric in i, j)
    v_e = jnp.concatenate(
        [vhm * vhm[i:i + 1, :] for i in range(n)], axis=0)   # (N*N, F)

    # ---- edge GRU: e_h = e_cells[layer](v_e, e_h) ----
    e_h = gru(v_e, e_h_sc[...],
              ewx_ref[0], ewh_ref[0], ebx_ref[0], ebh_ref[0])
    e_h_sc[...] = e_h

    # ---- Epack.unpack (mask) + goodmax over dim=1 (the "i" index) ----
    e_up = e_h * em_ref[0]                        # (N*N, F)
    e_v = e_up[0:n, :]
    for i in range(1, n):                         # static unroll, max over i
        e_v = jnp.maximum(e_v, e_up[i * n:(i + 1) * n, :])
    e_v_sc[...] = e_v                             # (N, F), indexed by j

    # ---- only the last layer materializes the HBM outputs ----
    @pl.when(layer == pl.num_programs(1) - 1)
    def _finalize():
        e_out_ref[0] = e_up                       # == ep.unpack(e_h)
        v_out_ref[0] = vhm                        # == last layer's v_h_up


# ------------------------------- wrapper ---------------------------------
def evmp_multilayer_forward(params, e, v, e_mask, v_mask):
    """EVMPMultiLayer forward (CustomGRU cells, vert_combine='prod')."""
    B, N, _, F = e.shape
    L = params["v_wx"].shape[0]
    F3 = 3 * F

    vm = (v_mask > 0).astype(jnp.float32).reshape(B, N, 1)
    em = (e_mask > 0).astype(jnp.float32).reshape(B, N * N, 1)
    v2 = v.astype(jnp.float32)
    e2 = e.astype(jnp.float32).reshape(B, N * N, F)

    kernel = functools.partial(_evmp_kernel, n=N, f=F)

    batch_idx = lambda b, l: (b, 0, 0)
    layer_idx = lambda b, l: (l, 0, 0)

    # TODO(synk): for large MAX_N / F (e.g. on v7x's 64 MiB VMEM) tile the
    # edge state along its leading N axis instead of holding one (N*N, F)
    # block per batch.
    e_out, v_out = pl.pallas_call(
        kernel,
        out_shape=(
            jax.ShapeDtypeStruct((B, N * N, F), jnp.float32),
            jax.ShapeDtypeStruct((B, N, F), jnp.float32),
        ),
        grid_spec=pltpu.PrefetchScalarGridSpec(
            num_scalar_prefetch=0,
            grid=(B, L),                                   # batch outer, layers inner
            in_specs=[
                pl.BlockSpec((1, N, F), batch_idx),        # v
                pl.BlockSpec((1, N * N, F), batch_idx),    # e (rows flattened)
                pl.BlockSpec((1, N, 1), batch_idx),        # vertex mask (0/1)
                pl.BlockSpec((1, N * N, 1), batch_idx),    # edge mask (0/1)
                pl.BlockSpec((1, F, F3), layer_idx),       # v_cell Wx (stacked r,z,n)
                pl.BlockSpec((1, F, F3), layer_idx),       # v_cell Wh
                pl.BlockSpec((1, 1, F3), layer_idx),       # v_cell bx
                pl.BlockSpec((1, 1, F3), layer_idx),       # v_cell bh
                pl.BlockSpec((1, F, F3), layer_idx),       # e_cell Wx
                pl.BlockSpec((1, F, F3), layer_idx),       # e_cell Wh
                pl.BlockSpec((1, 1, F3), layer_idx),       # e_cell bx
                pl.BlockSpec((1, 1, F3), layer_idx),       # e_cell bh
            ],
            out_specs=[
                pl.BlockSpec((1, N * N, F), batch_idx),    # masked e_h (last layer)
                pl.BlockSpec((1, N, F), batch_idx),        # masked v_h (last layer)
            ],
            scratch_shapes=[
                pltpu.VMEM((N, F), jnp.float32),           # v_h state
                pltpu.VMEM((N * N, F), jnp.float32),       # e_h state
                pltpu.VMEM((N, F), jnp.float32),           # e_v state
            ],
        ),
        compiler_params=pltpu.CompilerParams(
            dimension_semantics=("parallel", "arbitrary")),
    )(v2, e2, vm, em,
      params["v_wx"], params["v_wh"], params["v_bx"], params["v_bh"],
      params["e_wx"], params["e_wh"], params["e_bx"], params["e_bh"])

    return e_out.reshape(B, N, N, F), v_out


# -------------------- pure-JAX reference (same dense math) ---------------
def _ref_gru(x, h, wx, wh, bx, bh):
    F = x.shape[-1]
    gx = x @ wx + bx
    gh = h @ wh + bh
    r = jax.nn.sigmoid(gx[:, :F] + gh[:, :F])
    z = jax.nn.sigmoid(gx[:, F:2 * F] + gh[:, F:2 * F])
    cand = jnp.tanh(gx[:, 2 * F:] + r * gh[:, 2 * F:])
    return (1.0 - z) * cand + z * h


def ref_forward(params, e, v, e_mask, v_mask):
    B, N, _, F = e.shape
    vm = (v_mask > 0).astype(jnp.float32).reshape(B, N, 1)
    em = (e_mask > 0).astype(jnp.float32).reshape(B, N, N, 1)
    L = params["v_wx"].shape[0]
    v_h = v.reshape(B * N, F)
    e_h = e.reshape(B * N * N, F)
    e_v = jnp.zeros_like(v_h)
    e_h_up, v_h_up = None, None
    for i in range(L):
        v_h = _ref_gru(e_v, v_h, params["v_wx"][i], params["v_wh"][i],
                       params["v_bx"][i], params["v_bh"][i])
        v_h_up = v_h.reshape(B, N, F) * vm
        v_e = v_h_up[:, :, None, :] * v_h_up[:, None, :, :]
        e_h = _ref_gru(v_e.reshape(B * N * N, F), e_h,
                       params["e_wx"][i], params["e_wh"][i],
                       params["e_bx"][i], params["e_bh"][i])
        e_h_up = e_h.reshape(B, N, N, F) * em
        e_v = jnp.max(e_h_up, axis=1).reshape(B * N, F)
    return e_h_up, v_h_up


# ------------------------------- params ----------------------------------
def init_params(key, F, L):
    """CustomGRU params, gates stacked along the output dim in (r, z, n) order.

    Weights are pre-transposed so kernels compute x @ W (torch does x @ W.T).
    """
    bound = 1.0 / math.sqrt(F)
    ks = jax.random.split(key, 8)
    u = lambda k, s: jax.random.uniform(k, s, jnp.float32, -bound, bound)
    w_shape, b_shape = (L, F, 3 * F), (L, 1, 3 * F)
    return {
        "v_wx": u(ks[0], w_shape), "v_wh": u(ks[1], w_shape),
        "v_bx": u(ks[2], b_shape), "v_bh": u(ks[3], b_shape),
        "e_wx": u(ks[4], w_shape), "e_wh": u(ks[5], w_shape),
        "e_bx": u(ks[6], b_shape), "e_bh": u(ks[7], b_shape),
    }


if __name__ == "__main__":
    B, MAX_N, F, STEP_N = 2, 8, 32, 3

    key = jax.random.PRNGKey(0)
    k_e, k_v, k_vm, k_p = jax.random.split(key, 4)

    v = jax.random.normal(k_v, (B, MAX_N, F), jnp.float32)
    e = jax.random.normal(k_e, (B, MAX_N, MAX_N, F), jnp.float32)
    v_mask = (jax.random.uniform(k_vm, (B, MAX_N)) > 0.3).astype(jnp.float32)
    e_mask = v_mask[:, :, None] * v_mask[:, None, :]

    params = init_params(k_p, F, STEP_N)

    e_out, v_out = jax.jit(evmp_multilayer_forward)(params, e, v, e_mask, v_mask)
    jax.block_until_ready((e_out, v_out))

    e_ref, v_ref = ref_forward(params, e, v, e_mask, v_mask)
    assert e_out.shape == (B, MAX_N, MAX_N, F)
    assert v_out.shape == (B, MAX_N, F)
    assert jnp.allclose(e_out, e_ref, atol=2e-4, rtol=2e-4)
    assert jnp.allclose(v_out, v_ref, atol=2e-4, rtol=2e-4)
    print("KERNEL_OK")
</pallas_src>

<mosaic_0001>
module attributes {stable_mosaic.version = 11 : i64} {
  func.func @_evmp_kernel(%arg0: i32, %arg1: i32, %arg2: memref<1x8x32xf32, #tpu.memory_space<vmem>>, %arg3: memref<1x64x32xf32, #tpu.memory_space<vmem>>, %arg4: memref<1x8x1xf32, #tpu.memory_space<vmem>>, %arg5: memref<1x64x1xf32, #tpu.memory_space<vmem>>, %arg6: memref<1x32x96xf32, #tpu.memory_space<vmem>>, %arg7: memref<1x32x96xf32, #tpu.memory_space<vmem>>, %arg8: memref<1x1x96xf32, #tpu.memory_space<vmem>>, %arg9: memref<1x1x96xf32, #tpu.memory_space<vmem>>, %arg10: memref<1x32x96xf32, #tpu.memory_space<vmem>>, %arg11: memref<1x32x96xf32, #tpu.memory_space<vmem>>, %arg12: memref<1x1x96xf32, #tpu.memory_space<vmem>>, %arg13: memref<1x1x96xf32, #tpu.memory_space<vmem>>, %arg14: memref<1x64x32xf32, #tpu.memory_space<vmem>>, %arg15: memref<1x8x32xf32, #tpu.memory_space<vmem>>, %arg16: memref<8x32xf32, #tpu.memory_space<vmem>>, %arg17: memref<64x32xf32, #tpu.memory_space<vmem>>, %arg18: memref<8x32xf32, #tpu.memory_space<vmem>>) attributes {dimension_semantics = [#tpu.dimension_semantics<parallel>, #tpu.dimension_semantics<arbitrary>], iteration_bounds = array<i64: 2, 3>, scalar_prefetch = 0 : i64, scratch_operands = 3 : i64, tpu.core_type = #tpu.core_type<tc>, window_params = [{transform_indices = @transform_0, window_bounds = array<i64: 1, 8, 32>}, {transform_indices = @transform_1, window_bounds = array<i64: 1, 64, 32>}, {transform_indices = @transform_2, window_bounds = array<i64: 1, 8, 1>}, {transform_indices = @transform_3, window_bounds = array<i64: 1, 64, 1>}, {transform_indices = @transform_4, window_bounds = array<i64: 1, 32, 96>}, {transform_indices = @transform_5, window_bounds = array<i64: 1, 32, 96>}, {transform_indices = @transform_6, window_bounds = array<i64: 1, 1, 96>}, {transform_indices = @transform_7, window_bounds = array<i64: 1, 1, 96>}, {transform_indices = @transform_8, window_bounds = array<i64: 1, 32, 96>}, {transform_indices = @transform_9, window_bounds = array<i64: 1, 32, 96>}, {transform_indices = @transform_10, window_bounds = array<i64: 1, 1, 96>}, {transform_indices = @transform_11, window_bounds = array<i64: 1, 1, 96>}, {transform_indices = @transform_12, window_bounds = array<i64: 1, 64, 32>}, {transform_indices = @transform_13, window_bounds = array<i64: 1, 8, 32>}]} {
    %c0_i32 = arith.constant 0 : i32
    %0 = arith.cmpi eq, %arg1, %c0_i32 : i32
    %1 = arith.extui %0 : i1 to i32
    %c0_i32_0 = arith.constant 0 : i32
    %2 = arith.cmpi ne, %1, %c0_i32_0 : i32
    scf.if %2 {
      %c0_52 = arith.constant 0 : index
      %c0_53 = arith.constant 0 : index
      %c0_54 = arith.constant 0 : index
      %140 = vector.load %arg2[%c0_52, %c0_53, %c0_54] : memref<1x8x32xf32, #tpu.memory_space<vmem>>, vector<1x8x32xf32>
      %141 = vector.shape_cast %140 : vector<1x8x32xf32> to vector<8x32xf32>
      %c0_55 = arith.constant 0 : index
      %c0_56 = arith.constant 0 : index
      %142 = vector.load %arg16[%c0_55, %c0_56] : memref<8x32xf32, #tpu.memory_space<vmem>>, vector<8x32xf32>
      tpu.vector_store %arg16[%c0_55, %c0_56], %141 {strides = array<i32>} : memref<8x32xf32, #tpu.memory_space<vmem>>, vector<8x32xf32>,
      %c0_57 = arith.constant 0 : index
      %c0_58 = arith.constant 0 : index
      %c0_59 = arith.constant 0 : index
      %143 = vector.load %arg3[%c0_57, %c0_58, %c0_59] : memref<1x64x32xf32, #tpu.memory_space<vmem>>, vector<1x64x32xf32>
      %144 = vector.shape_cast %143 : vector<1x64x32xf32> to vector<64x32xf32>
      %c0_60 = arith.constant 0 : index
      %c0_61 = arith.constant 0 : index
      %145 = vector.load %arg17[%c0_60, %c0_61] : memref<64x32xf32, #tpu.memory_space<vmem>>, vector<64x32xf32>
      tpu.vector_store %arg17[%c0_60, %c0_61], %144 {strides = array<i32>} : memref<64x32xf32, #tpu.memory_space<vmem>>, vector<64x32xf32>,
      %cst_62 = arith.constant 0.000000e+00 : f32
      %146 = vector.broadcast %cst_62 : f32 to vector<8x32xf32>
      %c0_63 = arith.constant 0 : index
      %c0_64 = arith.constant 0 : index
      %147 = vector.load %arg18[%c0_63, %c0_64] : memref<8x32xf32, #tpu.memory_space<vmem>>, vector<8x32xf32>
      tpu.vector_store %arg18[%c0_63, %c0_64], %146 {strides = array<i32>} : memref<8x32xf32, #tpu.memory_space<vmem>>, vector<8x32xf32>,
    } else {
    }
    %c0 = arith.constant 0 : index
    %c0_1 = arith.constant 0 : index
    %3 = vector.load %arg18[%c0, %c0_1] : memref<8x32xf32, #tpu.memory_space<vmem>>, vector<8x32xf32>
    %c0_2 = arith.constant 0 : index
    %c0_3 = arith.constant 0 : index
    %4 = vector.load %arg16[%c0_2, %c0_3] : memref<8x32xf32, #tpu.memory_space<vmem>>, vector<8x32xf32>
    %c0_4 = arith.constant 0 : index
    %c0_5 = arith.constant 0 : index
    %c0_6 = arith.constant 0 : index
    %5 = vector.load %arg6[%c0_4, %c0_5, %c0_6] : memref<1x32x96xf32, #tpu.memory_space<vmem>>, vector<1x32x96xf32>
    %6 = vector.shape_cast %5 : vector<1x32x96xf32> to vector<32x96xf32>
    %c0_7 = arith.constant 0 : index
    %c0_8 = arith.constant 0 : index
    %c0_9 = arith.constant 0 : index
    %7 = vector.load %arg7[%c0_7, %c0_8, %c0_9] : memref<1x32x96xf32, #tpu.memory_space<vmem>>, vector<1x32x96xf32>
    %8 = vector.shape_cast %7 : vector<1x32x96xf32> to vector<32x96xf32>
    %c0_10 = arith.constant 0 : index
    %c0_11 = arith.constant 0 : index
    %c0_12 = arith.constant 0 : index
    %9 = vector.load %arg8[%c0_10, %c0_11, %c0_12] : memref<1x1x96xf32, #tpu.memory_space<vmem>>, vector<1x1x96xf32>
    %10 = vector.shape_cast %9 : vector<1x1x96xf32> to vector<1x96xf32>
    %c0_13 = arith.constant 0 : index
    %c0_14 = arith.constant 0 : index
    %c0_15 = arith.constant 0 : index
    %11 = vector.load %arg9[%c0_13, %c0_14, %c0_15] : memref<1x1x96xf32, #tpu.memory_space<vmem>>, vector<1x1x96xf32>
    %12 = vector.shape_cast %11 : vector<1x1x96xf32> to vector<1x96xf32>
    %cst = arith.constant dense<0.000000e+00> : vector<8x96xf32>
    %13 = tpu.matmul %3, %6, %cst {dimension_numbers = #tpu.dot_dimension_numbers<[1], [0], [0], [1], [0, 0, 1, 1], [], []>} : vector<8x32xf32>, vector<32x96xf32>, vector<8x96xf32> -> vector<8x96xf32>
    %14 = vector.broadcast %10 : vector<1x96xf32> to vector<8x96xf32>
    %15 = arith.addf %13, %14 : vector<8x96xf32>
    %cst_16 = arith.constant dense<0.000000e+00> : vector<8x96xf32>
    %16 = tpu.matmul %4, %8, %cst_16 {dimension_numbers = #tpu.dot_dimension_numbers<[1], [0], [0], [1], [0, 0, 1, 1], [], []>} : vector<8x32xf32>, vector<32x96xf32>, vector<8x96xf32> -> vector<8x96xf32>
    %17 = vector.broadcast %12 : vector<1x96xf32> to vector<8x96xf32>
    %18 = arith.addf %16, %17 : vector<8x96xf32>
    %19 = vector.extract_strided_slice %15 {offsets = [0, 0], sizes = [8, 32], strides = [1, 1]} : vector<8x96xf32> to vector<8x32xf32>
    %20 = vector.extract_strided_slice %18 {offsets = [0, 0], sizes = [8, 32], strides = [1, 1]} : vector<8x96xf32> to vector<8x32xf32>
    %21 = arith.addf %19, %20 : vector<8x32xf32>
    %22 = arith.negf %21 : vector<8x32xf32>
    %23 = math.exp %22 : vector<8x32xf32>
    %cst_17 = arith.constant 1.000000e+00 : f32
    %24 = vector.broadcast %cst_17 : f32 to vector<8x32xf32>
    %25 = arith.addf %24, %23 : vector<8x32xf32>
    %26 = arith.divf %24, %25 : vector<8x32xf32>
    %27 = vector.extract_strided_slice %15 {offsets = [0, 32], sizes = [8, 32], strides = [1, 1]} : vector<8x96xf32> to vector<8x32xf32>
    %28 = vector.extract_strided_slice %18 {offsets = [0, 32], sizes = [8, 32], strides = [1, 1]} : vector<8x96xf32> to vector<8x32xf32>
    %29 = arith.addf %27, %28 : vector<8x32xf32>
    %30 = arith.negf %29 : vector<8x32xf32>
    %31 = math.exp %30 : vector<8x32xf32>
    %cst_18 = arith.constant 1.000000e+00 : f32
    %32 = vector.broadcast %cst_18 : f32 to vector<8x32xf32>
    %33 = arith.addf %32, %31 : vector<8x32xf32>
    %34 = arith.divf %32, %33 : vector<8x32xf32>
    %35 = vector.extract_strided_slice %15 {offsets = [0, 64], sizes = [8, 32], strides = [1, 1]} : vector<8x96xf32> to vector<8x32xf32>
    %36 = vector.extract_strided_slice %18 {offsets = [0, 64], sizes = [8, 32], strides = [1, 1]} : vector<8x96xf32> to vector<8x32xf32>
    %37 = arith.mulf %26, %36 : vector<8x32xf32>
    %38 = arith.addf %35, %37 : vector<8x32xf32>
    %39 = math.tanh %38 : vector<8x32xf32>
    %cst_19 = arith.constant 1.000000e+00 : f32
    %40 = vector.broadcast %cst_19 : f32 to vector<8x32xf32>
    %41 = arith.subf %40, %34 : vector<8x32xf32>
    %42 = arith.mulf %41, %39 : vector<8x32xf32>
    %43 = arith.mulf %34, %4 : vector<8x32xf32>
    %44 = arith.addf %42, %43 : vector<8x32xf32>
    %c0_20 = arith.constant 0 : index
    %c0_21 = arith.constant 0 : index
    %45 = vector.load %arg16[%c0_20, %c0_21] : memref<8x32xf32, #tpu.memory_space<vmem>>, vector<8x32xf32>
    tpu.vector_store %arg16[%c0_20, %c0_21], %44 {strides = array<i32>} : memref<8x32xf32, #tpu.memory_space<vmem>>, vector<8x32xf32>,
    %c0_22 = arith.constant 0 : index
    %c0_23 = arith.constant 0 : index
    %c0_24 = arith.constant 0 : index
    %46 = vector.load %arg4[%c0_22, %c0_23, %c0_24] : memref<1x8x1xf32, #tpu.memory_space<vmem>>, vector<1x8x1xf32>
    %47 = vector.shape_cast %46 : vector<1x8x1xf32> to vector<8x1xf32>
    %48 = vector.broadcast %47 : vector<8x1xf32> to vector<8x32xf32>
    %49 = arith.mulf %44, %48 : vector<8x32xf32>
    %50 = vector.extract_strided_slice %49 {offsets = [0, 0], sizes = [1, 32], strides = [1, 1]} : vector<8x32xf32> to vector<1x32xf32>
    %51 = vector.broadcast %50 : vector<1x32xf32> to vector<8x32xf32>
    %52 = arith.mulf %49, %51 : vector<8x32xf32>
    %53 = vector.extract_strided_slice %49 {offsets = [1, 0], sizes = [1, 32], strides = [1, 1]} : vector<8x32xf32> to vector<1x32xf32>
    %54 = vector.broadcast %53 : vector<1x32xf32> to vector<8x32xf32>
    %55 = arith.mulf %49, %54 : vector<8x32xf32>
    %56 = vector.extract_strided_slice %49 {offsets = [2, 0], sizes = [1, 32], strides = [1, 1]} : vector<8x32xf32> to vector<1x32xf32>
    %57 = vector.broadcast %56 : vector<1x32xf32> to vector<8x32xf32>
    %58 = arith.mulf %49, %57 : vector<8x32xf32>
    %59 = vector.extract_strided_slice %49 {offsets = [3, 0], sizes = [1, 32], strides = [1, 1]} : vector<8x32xf32> to vector<1x32xf32>
    %60 = vector.broadcast %59 : vector<1x32xf32> to vector<8x32xf32>
    %61 = arith.mulf %49, %60 : vector<8x32xf32>
    %62 = vector.extract_strided_slice %49 {offsets = [4, 0], sizes = [1, 32], strides = [1, 1]} : vector<8x32xf32> to vector<1x32xf32>
    %63 = vector.broadcast %62 : vector<1x32xf32> to vector<8x32xf32>
    %64 = arith.mulf %49, %63 : vector<8x32xf32>
    %65 = vector.extract_strided_slice %49 {offsets = [5, 0], sizes = [1, 32], strides = [1, 1]} : vector<8x32xf32> to vector<1x32xf32>
    %66 = vector.broadcast %65 : vector<1x32xf32> to vector<8x32xf32>
    %67 = arith.mulf %49, %66 : vector<8x32xf32>
    %68 = vector.extract_strided_slice %49 {offsets = [6, 0], sizes = [1, 32], strides = [1, 1]} : vector<8x32xf32> to vector<1x32xf32>
    %69 = vector.broadcast %68 : vector<1x32xf32> to vector<8x32xf32>
    %70 = arith.mulf %49, %69 : vector<8x32xf32>
    %71 = vector.extract_strided_slice %49 {offsets = [7, 0], sizes = [1, 32], strides = [1, 1]} : vector<8x32xf32> to vector<1x32xf32>
    %72 = vector.broadcast %71 : vector<1x32xf32> to vector<8x32xf32>
    %73 = arith.mulf %49, %72 : vector<8x32xf32>
    %74 = tpu.concatenate %52, %55, %58, %61, %64, %67, %70, %73 in 0 : vector<8x32xf32>, vector<8x32xf32>, vector<8x32xf32>, vector<8x32xf32>, vector<8x32xf32>, vector<8x32xf32>, vector<8x32xf32>, vector<8x32xf32> -> vector<64x32xf32>
    %c0_25 = arith.constant 0 : index
    %c0_26 = arith.constant 0 : index
    %75 = vector.load %arg17[%c0_25, %c0_26] : memref<64x32xf32, #tpu.memory_space<vmem>>, vector<64x32xf32>
    %c0_27 = arith.constant 0 : index
    %c0_28 = arith.constant 0 : index
    %c0_29 = arith.constant 0 : index
    %76 = vector.load %arg10[%c0_27, %c0_28, %c0_29] : memref<1x32x96xf32, #tpu.memory_space<vmem>>, vector<1x32x96xf32>
    %77 = vector.shape_cast %76 : vector<1x32x96xf32> to vector<32x96xf32>
    %c0_30 = arith.constant 0 : index
    %c0_31 = arith.constant 0 : index
    %c0_32 = arith.constant 0 : index
    %78 = vector.load %arg11[%c0_30, %c0_31, %c0_32] : memref<1x32x96xf32, #tpu.memory_space<vmem>>, vector<1x32x96xf32>
    %79 = vector.shape_cast %78 : vector<1x32x96xf32> to vector<32x96xf32>
    %c0_33 = arith.constant 0 : index
    %c0_34 = arith.constant 0 : index
    %c0_35 = arith.constant 0 : index
    %80 = vector.load %arg12[%c0_33, %c0_34, %c0_35] : memref<1x1x96xf32, #tpu.memory_space<vmem>>, vector<1x1x96xf32>
    %81 = vector.shape_cast %80 : vector<1x1x96xf32> to vector<1x96xf32>
    %c0_36 = arith.constant 0 : index
    %c0_37 = arith.constant 0 : index
    %c0_38 = arith.constant 0 : index
    %82 = vector.load %arg13[%c0_36, %c0_37, %c0_38] : memref<1x1x96xf32, #tpu.memory_space<vmem>>, vector<1x1x96xf32>
    %83 = vector.shape_cast %82 : vector<1x1x96xf32> to vector<1x96xf32>
    %cst_39 = arith.constant dense<0.000000e+00> : vector<64x96xf32>
    %84 = tpu.matmul %74, %77, %cst_39 {dimension_numbers = #tpu.dot_dimension_numbers<[1], [0], [0], [1], [0, 0, 1, 1], [], []>} : vector<64x32xf32>, vector<32x96xf32>, vector<64x96xf32> -> vector<64x96xf32>
    %85 = vector.broadcast %81 : vector<1x96xf32> to vector<64x96xf32>
    %86 = arith.addf %84, %85 : vector<64x96xf32>
    %cst_40 = arith.constant dense<0.000000e+00> : vector<64x96xf32>
    %87 = tpu.matmul %75, %79, %cst_40 {dimension_numbers = #tpu.dot_dimension_numbers<[1], [0], [0], [1], [0, 0, 1, 1], [], []>} : vector<64x32xf32>, vector<32x96xf32>, vector<64x96xf32> -> vector<64x96xf32>
    %88 = vector.broadcast %83 : vector<1x96xf32> to vector<64x96xf32>
    %89 = arith.addf %87, %88 : vector<64x96xf32>
    %90 = vector.extract_strided_slice %86 {offsets = [0, 0], sizes = [64, 32], strides = [1, 1]} : vector<64x96xf32> to vector<64x32xf32>
    %91 = vector.extract_strided_slice %89 {offsets = [0, 0], sizes = [64, 32], strides = [1, 1]} : vector<64x96xf32> to vector<64x32xf32>
    %92 = arith.addf %90, %91 : vector<64x32xf32>
    %93 = arith.negf %92 : vector<64x32xf32>
    %94 = math.exp %93 : vector<64x32xf32>
    %cst_41 = arith.constant 1.000000e+00 : f32
    %95 = vector.broadcast %cst_41 : f32 to vector<64x32xf32>
    %96 = arith.addf %95, %94 : vector<64x32xf32>
    %97 = arith.divf %95, %96 : vector<64x32xf32>
    %98 = vector.extract_strided_slice %86 {offsets = [0, 32], sizes = [64, 32], strides = [1, 1]} : vector<64x96xf32> to vector<64x32xf32>
    %99 = vector.extract_strided_slice %89 {offsets = [0, 32], sizes = [64, 32], strides = [1, 1]} : vector<64x96xf32> to vector<64x32xf32>
    %100 = arith.addf %98, %99 : vector<64x32xf32>
    %101 = arith.negf %100 : vector<64x32xf32>
    %102 = math.exp %101 : vector<64x32xf32>
    %cst_42 = arith.constant 1.000000e+00 : f32
    %103 = vector.broadcast %cst_42 : f32 to vector<64x32xf32>
    %104 = arith.addf %103, %102 : vector<64x32xf32>
    %105 = arith.divf %103, %104 : vector<64x32xf32>
    %106 = vector.extract_strided_slice %86 {offsets = [0, 64], sizes = [64, 32], strides = [1, 1]} : vector<64x96xf32> to vector<64x32xf32>
    %107 = vector.extract_strided_slice %89 {offsets = [0, 64], sizes = [64, 32], strides = [1, 1]} : vector<64x96xf32> to vector<64x32xf32>
    %108 = arith.mulf %97, %107 : vector<64x32xf32>
    %109 = arith.addf %106, %108 : vector<64x32xf32>
    %110 = math.tanh %109 : vector<64x32xf32>
    %cst_43 = arith.constant 1.000000e+00 : f32
    %111 = vector.broadcast %cst_43 : f32 to vector<64x32xf32>
    %112 = arith.subf %111, %105 : vector<64x32xf32>
    %113 = arith.mulf %112, %110 : vector<64x32xf32>
    %114 = arith.mulf %105, %75 : vector<64x32xf32>
    %115 = arith.addf %113, %114 : vector<64x32xf32>
    %c0_44 = arith.constant 0 : index
    %c0_45 = arith.constant 0 : index
    %116 = vector.load %arg17[%c0_44, %c0_45] : memref<64x32xf32, #tpu.memory_space<vmem>>, vector<64x32xf32>
    tpu.vector_store %arg17[%c0_44, %c0_45], %115 {strides = array<i32>} : memref<64x32xf32, #tpu.memory_space<vmem>>, vector<64x32xf32>,
    %c0_46 = arith.constant 0 : index
    %c0_47 = arith.constant 0 : index
    %c0_48 = arith.constant 0 : index
    %117 = vector.load %arg5[%c0_46, %c0_47, %c0_48] : memref<1x64x1xf32, #tpu.memory_space<vmem>>, vector<1x64x1xf32>
    %118 = vector.shape_cast %117 : vector<1x64x1xf32> to vector<64x1xf32>
    %119 = vector.broadcast %118 : vector<64x1xf32> to vector<64x32xf32>
    %120 = arith.mulf %115, %119 : vector<64x32xf32>
    %121 = vector.extract_strided_slice %120 {offsets = [0, 0], sizes = [8, 32], strides = [1, 1]} : vector<64x32xf32> to vector<8x32xf32>
    %122 = vector.extract_strided_slice %120 {offsets = [8, 0], sizes = [8, 32], strides = [1, 1]} : vector<64x32xf32> to vector<8x32xf32>
    %123 = arith.maximumf %121, %122 : vector<8x32xf32>
    %124 = vector.extract_strided_slice %120 {offsets = [16, 0], sizes = [8, 32], strides = [1, 1]} : vector<64x32xf32> to vector<8x32xf32>
    %125 = arith.maximumf %123, %124 : vector<8x32xf32>
    %126 = vector.extract_strided_slice %120 {offsets = [24, 0], sizes = [8, 32], strides = [1, 1]} : vector<64x32xf32> to vector<8x32xf32>
    %127 = arith.maximumf %125, %126 : vector<8x32xf32>
    %128 = vector.extract_strided_slice %120 {offsets = [32, 0], sizes = [8, 32], strides = [1, 1]} : vector<64x32xf32> to vector<8x32xf32>
    %129 = arith.maximumf %127, %128 : vector<8x32xf32>
    %130 = vector.extract_strided_slice %120 {offsets = [40, 0], sizes = [8, 32], strides = [1, 1]} : vector<64x32xf32> to vector<8x32xf32>
    %131 = arith.maximumf %129, %130 : vector<8x32xf32>
    %132 = vector.extract_strided_slice %120 {offsets = [48, 0], sizes = [8, 32], strides = [1, 1]} : vector<64x32xf32> to vector<8x32xf32>
    %133 = arith.maximumf %131, %132 : vector<8x32xf32>
    %134 = vector.extract_strided_slice %120 {offsets = [56, 0], sizes = [8, 32], strides = [1, 1]} : vector<64x32xf32> to vector<8x32xf32>
    %135 = arith.maximumf %133, %134 : vector<8x32xf32>
    %c0_49 = arith.constant 0 : index
    %c0_50 = arith.constant 0 : index
    %136 = vector.load %arg18[%c0_49, %c0_50] : memref<8x32xf32, #tpu.memory_space<vmem>>, vector<8x32xf32>
    tpu.vector_store %arg18[%c0_49, %c0_50], %135 {strides = array<i32>} : memref<8x32xf32, #tpu.memory_space<vmem>>, vector<8x32xf32>,
    %c2_i32 = arith.constant 2 : i32
    %137 = arith.cmpi eq, %arg1, %c2_i32 : i32
    %138 = arith.extui %137 : i1 to i32
    %c0_i32_51 = arith.constant 0 : i32
    %139 = arith.cmpi ne, %138, %c0_i32_51 : i32
    scf.if %139 {
      %c0_52 = arith.constant 0 : index
      %c0_53 = arith.constant 0 : index
      %c0_54 = arith.constant 0 : index
      %140 = vector.load %arg14[%c0_52, %c0_53, %c0_54] : memref<1x64x32xf32, #tpu.memory_space<vmem>>, vector<1x64x32xf32>
      %141 = vector.shape_cast %140 : vector<1x64x32xf32> to vector<64x32xf32>
      %142 = vector.shape_cast %120 : vector<64x32xf32> to vector<1x64x32xf32>
      tpu.vector_store %arg14[%c0_52, %c0_53, %c0_54], %142 {strides = array<i32>} : memref<1x64x32xf32, #tpu.memory_space<vmem>>, vector<1x64x32xf32>,
      %c0_55 = arith.constant 0 : index
      %c0_56 = arith.constant 0 : index
      %c0_57 = arith.constant 0 : index
      %143 = vector.load %arg15[%c0_55, %c0_56, %c0_57] : memref<1x8x32xf32, #tpu.memory_space<vmem>>, vector<1x8x32xf32>
      %144 = vector.shape_cast %143 : vector<1x8x32xf32> to vector<8x32xf32>
      %145 = vector.shape_cast %49 : vector<8x32xf32> to vector<1x8x32xf32>
      tpu.vector_store %arg15[%c0_55, %c0_56, %c0_57], %145 {strides = array<i32>} : memref<1x8x32xf32, #tpu.memory_space<vmem>>, vector<1x8x32xf32>,
    } else {
    }
    return
  }
  func.func @transform_0(%arg0: i32, %arg1: i32) -> (i32, i32, i32) {
    %c0_i32 = arith.constant 0 : i32
    %c0_i32_0 = arith.constant 0 : i32
    %c0_i32_1 = arith.constant 0 : i32
    return %arg0, %c0_i32, %c0_i32_0 : i32, i32, i32
  }
  func.func @transform_1(%arg0: i32, %arg1: i32) -> (i32, i32, i32) {
    %c0_i32 = arith.constant 0 : i32
    %c0_i32_0 = arith.constant 0 : i32
    %c0_i32_1 = arith.constant 0 : i32
    return %arg0, %c0_i32, %c0_i32_0 : i32, i32, i32
  }
  func.func @transform_2(%arg0: i32, %arg1: i32) -> (i32, i32, i32) {
    %c0_i32 = arith.constant 0 : i32
    %c0_i32_0 = arith.constant 0 : i32
    %c0_i32_1 = arith.constant 0 : i32
    return %arg0, %c0_i32, %c0_i32_0 : i32, i32, i32
  }
  func.func @transform_3(%arg0: i32, %arg1: i32) -> (i32, i32, i32) {
    %c0_i32 = arith.constant 0 : i32
    %c0_i32_0 = arith.constant 0 : i32
    %c0_i32_1 = arith.constant 0 : i32
    return %arg0, %c0_i32, %c0_i32_0 : i32, i32, i32
  }
  func.func @transform_4(%arg0: i32, %arg1: i32) -> (i32, i32, i32) {
    %c0_i32 = arith.constant 0 : i32
    %c0_i32_0 = arith.constant 0 : i32
    %c0_i32_1 = arith.constant 0 : i32
    return %arg1, %c0_i32, %c0_i32_0 : i32, i32, i32
  }
  func.func @transform_5(%arg0: i32, %arg1: i32) -> (i32, i32, i32) {
    %c0_i32 = arith.constant 0 : i32
    %c0_i32_0 = arith.constant 0 : i32
    %c0_i32_1 = arith.constant 0 : i32
    return %arg1, %c0_i32, %c0_i32_0 : i32, i32, i32
  }
  func.func @transform_6(%arg0: i32, %arg1: i32) -> (i32, i32, i32) {
    %c0_i32 = arith.constant 0 : i32
    %c0_i32_0 = arith.constant 0 : i32
    %c0_i32_1 = arith.constant 0 : i32
    return %arg1, %c0_i32, %c0_i32_0 : i32, i32, i32
  }
  func.func @transform_7(%arg0: i32, %arg1: i32) -> (i32, i32, i32) {
    %c0_i32 = arith.constant 0 : i32
    %c0_i32_0 = arith.constant 0 : i32
    %c0_i32_1 = arith.constant 0 : i32
    return %arg1, %c0_i32, %c0_i32_0 : i32, i32, i32
  }
  func.func @transform_8(%arg0: i32, %arg1: i32) -> (i32, i32, i32) {
    %c0_i32 = arith.constant 0 : i32
    %c0_i32_0 = arith.constant 0 : i32
    %c0_i32_1 = arith.constant 0 : i32
    return %arg1, %c0_i32, %c0_i32_0 : i32, i32, i32
  }
  func.func @transform_9(%arg0: i32, %arg1: i32) -> (i32, i32, i32) {
    %c0_i32 = arith.constant 0 : i32
    %c0_i32_0 = arith.constant 0 : i32
    %c0_i32_1 = arith.constant 0 : i32
    return %arg1, %c0_i32, %c0_i32_0 : i32, i32, i32
  }
  func.func @transform_10(%arg0: i32, %arg1: i32) -> (i32, i32, i32) {
    %c0_i32 = arith.constant 0 : i32
    %c0_i32_0 = arith.constant 0 : i32
    %c0_i32_1 = arith.constant 0 : i32
    return %arg1, %c0_i32, %c0_i32_0 : i32, i32, i32
  }
  func.func @transform_11(%arg0: i32, %arg1: i32) -> (i32, i32, i32) {
    %c0_i32 = arith.constant 0 : i32
    %c0_i32_0 = arith.constant 0 : i32
    %c0_i32_1 = arith.constant 0 : i32
    return %arg1, %c0_i32, %c0_i32_0 : i32, i32, i32
  }
  func.func @transform_12(%arg0: i32, %arg1: i32) -> (i32, i32, i32) {
    %c0_i32 = arith.constant 0 : i32
    %c0_i32_0 = arith.constant 0 : i32
    %c0_i32_1 = arith.constant 0 : i32
    return %arg0, %c0_i32, %c0_i32_0 : i32, i32, i32
  }
  func.func @transform_13(%arg0: i32, %arg1: i32) -> (i32, i32, i32) {
    %c0_i32 = arith.constant 0 : i32
    %c0_i32_0 = arith.constant 0 : i32
    %c0_i32_1 = arith.constant 0 : i32
    return %arg0, %c0_i32, %c0_i32_0 : i32, i32, i32
  }
}

</mosaic_0001>

<llo_original>
// kernel: evmp_multilayer_forward.1
$region0: #{evmp_multilayer_forward.1}
  #allocation0 [shape = 'u32[]', space=smem, size = 0x4, offset = 0x4, fixed_abs, tag = 'smem constant byte address 0x4 - core index']
  #allocation1 [shape = 'u32[72,128]{1,0:T(1,128)}', space=vmem, size = 0x9000, scoped, tag = 'internal scratch']
  #allocation2 [shape = 'f32[8,32]{1,0:T(8,128)}', space=vmem, size = 0x1000, scoped, tag = 'scratch operand']
  #allocation3 [shape = 'f32[64,32]{1,0:T(8,128)}', space=vmem, size = 0x8000, scoped, tag = 'scratch operand']
  #allocation4 [shape = 'f32[8,32]{1,0:T(8,128)}', space=vmem, size = 0x1000, scoped, tag = 'scratch operand']
  %s0 = inlined_call_operand.vmem [shape: f32[2,8,32], index: 0, kind: input, shape index: {}]
  %s1 = inlined_call_operand.vmem [shape: f32[2,64,32], index: 1, kind: input, shape index: {}]
  %s2 = inlined_call_operand.vmem [shape: f32[2,8,1], index: 2, kind: input, shape index: {}]
  %s3 = inlined_call_operand.vmem [shape: f32[2,64,1], index: 3, kind: input, shape index: {}]
  %s4 = inlined_call_operand.hbm [shape: f32[3,32,96], index: 4, kind: input, shape index: {}]
  %s5 = inlined_call_operand.hbm [shape: f32[3,32,96], index: 5, kind: input, shape index: {}]
  %s6 = inlined_call_operand.vmem [shape: f32[3,1,96], index: 6, kind: input, shape index: {}]
  %s7 = inlined_call_operand.vmem [shape: f32[3,1,96], index: 7, kind: input, shape index: {}]
  %s8 = inlined_call_operand.hbm [shape: f32[3,32,96], index: 8, kind: input, shape index: {}]
  %s9 = inlined_call_operand.hbm [shape: f32[3,32,96], index: 9, kind: input, shape index: {}]
  %s10 = inlined_call_operand.vmem [shape: f32[3,1,96], index: 10, kind: input, shape index: {}]
  %s11 = inlined_call_operand.vmem [shape: f32[3,1,96], index: 11, kind: input, shape index: {}]
  %s12 = inlined_call_operand.hbm [shape: f32[2,64,32], index: 12, kind: output, shape index: {0}]
  %s13 = inlined_call_operand.hbm [shape: f32[2,8,32], index: 13, kind: output, shape index: {1}]
  %14 = xla_tuple %s12, %s13
  %s15 = sld [smem:[#allocation0]]
  $region113: #{evmp_multilayer_forward.1} parent=0
    _
  %s17 = ssub.s32 1, %s15
  %s18 = scalar_select 0, %s17, %s15
  $region1: #{evmp_multilayer_forward.1} parent=0
    #allocation5 [shape = 'u8[32768]{0}', space=vmem, size = 0x8000, scoped, tag = 'input window, operand 4']
    #allocation6 [shape = 's32[2]{0}', space=sflag, size = 0x8, scoped, tag = 'scoped memory for evmp_multilayer_forward.1']
    #allocation7 [shape = 's32[2]{0}', space=sflag, size = 0x8, scoped, tag = 'scoped memory for evmp_multilayer_forward.1']
    #allocation8 [shape = 'u8[32768]{0}', space=vmem, size = 0x8000, scoped, tag = 'input window, operand 5']
    #allocation9 [shape = 's32[2]{0}', space=sflag, size = 0x8, scoped, tag = 'scoped memory for evmp_multilayer_forward.1']
    #allocation10 [shape = 'u8[32768]{0}', space=vmem, size = 0x8000, scoped, tag = 'input window, operand 8']
    #allocation11 [shape = 'u8[32768]{0}', space=vmem, size = 0x8000, scoped, tag = 'input window, operand 9']
    #allocation12 [shape = 's32[2]{0}', space=sflag, size = 0x8, scoped, tag = 'scoped memory for evmp_multilayer_forward.1']
    #allocation13 [shape = 'u8[65536]{0}', space=vmem, size = 0x10000, scoped, tag = 'output window, operand 0']
    #allocation14 [shape = 'u8[8192]{0}', space=vmem, size = 0x2000, scoped, tag = 'output window, operand 1']
    #allocation15 [shape = 's32[2]{0}', space=sflag, size = 0x8, scoped, tag = 'scoped memory for evmp_multilayer_forward.1']
    %19 = vsyncpa [#allocation6], 0
    %s20 = scalar_lea.sflag [#allocation6], 1
    %21 = vsyncpa %s20, 0
    %22 = vsyncpa [#allocation9], 0
    %s23 = scalar_lea.sflag [#allocation9], 1
    %24 = vsyncpa %s23, 0
    %25 = vsyncpa [#allocation12], 0
    %s26 = scalar_lea.sflag [#allocation12], 1
    %27 = vsyncpa %s26, 0
    %28 = vsyncpa [#allocation7], 0
    %s29 = scalar_lea.sflag [#allocation7], 1
    %30 = vsyncpa %s29, 0
    %31 = vsyncpa [#allocation15], 0
    %s32 = scalar_lea.sflag [#allocation15], 1
    %33 = vsyncpa %s32, 0
    loop: start=0, step=1, limit=8
    $region2: #{evmp_multilayer_forward.1} parent=1 // loop_pre_header
      _
    $region3: #{evmp_multilayer_forward.1} parent=1 // loop_header
      %s35 = sphi 0, %s39
      %p36 = scmp.ge.s32.totalorder %s35, 8
      %s42 = sphi 0, %s54
      %s43 = sphi 0, %s50
      %s44 = sphi 0, %s42
      %s45 = sphi 0, %s43
      %s46 = sphi 0, %s44
      %s47 = sphi 0, %s45
      %s57 = sphi 0, %s59
      %s60 = sphi 0, %s57
      %s61 = sphi 0, %s60
      %s77 = sphi 0, %s61
      %s83 = sphi 0, %s85
      %s86 = sphi 0, %s83
      %s87 = sphi 0, %s86
      %s103 = sphi 0, %s87
      %s109 = sphi 0, %s111
      %s112 = sphi 0, %s109
      %s113 = sphi 0, %s112
      %s129 = sphi 0, %s113
      %s135 = sphi 0, %s137
      %s138 = sphi 0, %s135
      %s139 = sphi 0, %s138
      %s155 = sphi 0, %s139
      %s161 = sphi 0, %s163
      %s164 = sphi 0, %s161
      %s165 = sphi 0, %s164
      %s181 = sphi 0, %s165
      %s187 = sphi 0, %s189
      %s190 = sphi 0, %s187
      %s191 = sphi 0, %s190
      %s207 = sphi 0, %s191
      %s213 = sphi 0, %s215
      %s216 = sphi 0, %s213
      %s217 = sphi 0, %s216
      %s233 = sphi 0, %s217
      %s239 = sphi 0, %s241
      %s242 = sphi 0, %s239
      %s243 = sphi 0, %s242
      %s259 = sphi 0, %s243
      %s265 = sphi 0, %s267
      %s268 = sphi 0, %s265
      %s269 = sphi 0, %s268
      %s285 = sphi 0, %s269
      %s291 = sphi 0, %s293
      %s294 = sphi 0, %s291
      %s295 = sphi 0, %s294
      %s311 = sphi 0, %s295
      %s317 = sphi 0, %s319
      %s320 = sphi 0, %s317
      %s321 = sphi 0, %s320
      %s337 = sphi 0, %s321
      %s343 = sphi 0, %s345
      %s346 = sphi 0, %s343
      %s347 = sphi 0, %s346
      %s363 = sphi 0, %s347
      %s369 = sphi 0, %s371
      %s372 = sphi 0, %s369
      %s373 = sphi 0, %s372
      %s389 = sphi 0, %s373
      %s395 = sphi 0, %s397
      %s398 = sphi 0, %s395
      %s399 = sphi 0, %s398
      %s415 = sphi 0, %s399
    $region4: #{evmp_multilayer_forward.1} parent=1 // loop_header_branch
      %38 = sbr.rel (%p36) target = $region8
    $region5: #{evmp_multilayer_forward.1} parent=1 // loop_body
      %s40 = ssub.s32 %s35, 1
      %s41 = ssub.s32 %s35, 2
      %s48 = sadd.s32 1, %s43
      %p49 = scmp.ge.s32.totalorder %s48, 3
      %s50 = scalar_select %p49, 0, %s48
      %s51 = sadd.s32 1, %s42
      %s52 = scalar_select %p49, %s51, %s42
      %p53 = scmp.ge.s32.totalorder %s52, 2
      %s54 = scalar_select %p53, 0, %s52
      %s55 = ssub.s32 %s42, %s54
      %p56 = scmp.eq.s32.totalorder %s55, 0
      %s58 = sadd.s32 %s57, 1
      %s59 = scalar_select %p56, %s57, %s58
      %p62 = pneg %p56
      %p63 = scmp.eq.s32.totalorder %s35, 5
      %p64 = por %p62, %p63
      %p65 = scmp.ne.s32.totalorder %s57, %s60
      %p66 = scmp.eq.s32.totalorder %s35, 0
      %p67 = por %p65, %p66
      %p68 = scmp.ne.s32.totalorder %s57, %s60
      %p69 = scmp.eq.s32.totalorder %s40, 5
      %p70 = por %p68, %p69
      %p71 = scmp.ne.s32.totalorder %s60, %s61
      %p72 = scmp.eq.s32.totalorder %s40, 0
      %p73 = por %p71, %p72
      %p74 = scmp.ne.s32.totalorder %s60, %s61
      %p75 = scmp.eq.s32.totalorder %s41, 5
      %p76 = por %p74, %p75
      %p78 = scmp.ne.s32.totalorder %s61, %s77
      %p79 = scmp.eq.s32.totalorder %s41, 0
      %p80 = por %p78, %p79
      %s81 = ssub.s32 %s42, %s54
      %p82 = scmp.eq.s32.totalorder %s81, 0
      %s84 = sadd.s32 %s83, 1
      %s85 = scalar_select %p82, %s83, %s84
      %p88 = pneg %p82
      %p89 = scmp.eq.s32.totalorder %s35, 5
      %p90 = por %p88, %p89
      %p91 = scmp.ne.s32.totalorder %s83, %s86
      %p92 = scmp.eq.s32.totalorder %s35, 0
      %p93 = por %p91, %p92
      %p94 = scmp.ne.s32.totalorder %s83, %s86
      %p95 = scmp.eq.s32.totalorder %s40, 5
      %p96 = por %p94, %p95
      %p97 = scmp.ne.s32.totalorder %s86, %s87
      %p98 = scmp.eq.s32.totalorder %s40, 0
      %p99 = por %p97, %p98
      %p100 = scmp.ne.s32.totalorder %s86, %s87
      %p101 = scmp.eq.s32.totalorder %s41, 5
      %p102 = por %p100, %p101
      %p104 = scmp.ne.s32.totalorder %s87, %s103
      %p105 = scmp.eq.s32.totalorder %s41, 0
      %p106 = por %p104, %p105
      %s107 = ssub.s32 %s42, %s54
      %p108 = scmp.eq.s32.totalorder %s107, 0
      %s110 = sadd.s32 %s109, 1
      %s111 = scalar_select %p108, %s109, %s110
      %p114 = pneg %p108
      %p115 = scmp.eq.s32.totalorder %s35, 5
      %p116 = por %p114, %p115
      %p117 = scmp.ne.s32.totalorder %s109, %s112
      %p118 = scmp.eq.s32.totalorder %s35, 0
      %p119 = por %p117, %p118
      %p120 = scmp.ne.s32.totalorder %s109, %s112
      %p121 = scmp.eq.s32.totalorder %s40, 5
      %p122 = por %p120, %p121
      %p123 = scmp.ne.s32.totalorder %s112, %s113
      %p124 = scmp.eq.s32.totalorder %s40, 0
      %p125 = por %p123, %p124
      %p126 = scmp.ne.s32.totalorder %s112, %s113
      %p127 = scmp.eq.s32.totalorder %s41, 5
      %p128 = por %p126, %p127
      %p130 = scmp.ne.s32.totalorder %s113, %s129
      %p131 = scmp.eq.s32.totalorder %s41, 0
      %p132 = por %p130, %p131
      %s133 = ssub.s32 %s42, %s54
      %p134 = scmp.eq.s32.totalorder %s133, 0
      %s136 = sadd.s32 %s135, 1
      %s137 = scalar_select %p134, %s135, %s136
      %p140 = pneg %p134
      %p141 = scmp.eq.s32.totalorder %s35, 5
      %p142 = por %p140, %p141
      %p143 = scmp.ne.s32.totalorder %s135, %s138
      %p144 = scmp.eq.s32.totalorder %s35, 0
      %p145 = por %p143, %p144
      %p146 = scmp.ne.s32.totalorder %s135, %s138
      %p147 = scmp.eq.s32.totalorder %s40, 5
      %p148 = por %p146, %p147
      %p149 = scmp.ne.s32.totalorder %s138, %s139
      %p150 = scmp.eq.s32.totalorder %s40, 0
      %p151 = por %p149, %p150
      %p152 = scmp.ne.s32.totalorder %s138, %s139
      %p153 = scmp.eq.s32.totalorder %s41, 5
      %p154 = por %p152, %p153
      %p156 = scmp.ne.s32.totalorder %s139, %s155
      %p157 = scmp.eq.s32.totalorder %s41, 0
      %p158 = por %p156, %p157
      %s159 = ssub.s32 %s43, %s50
      %p160 = scmp.eq.s32.totalorder %s159, 0
      %s162 = sadd.s32 %s161, 1
      %s163 = scalar_select %p160, %s161, %s162
      %p166 = pneg %p160
      %p167 = scmp.eq.s32.totalorder %s35, 5
      %p168 = por %p166, %p167
      %p169 = scmp.ne.s32.totalorder %s161, %s164
      %p170 = scmp.eq.s32.totalorder %s35, 0
      %p171 = por %p169, %p170
      %p172 = scmp.ne.s32.totalorder %s161, %s164
      %p173 = scmp.eq.s32.totalorder %s40, 5
      %p174 = por %p172, %p173
      %p175 = scmp.ne.s32.totalorder %s164, %s165
      %p176 = scmp.eq.s32.totalorder %s40, 0
      %p177 = por %p175, %p176
      %p178 = scmp.ne.s32.totalorder %s164, %s165
      %p179 = scmp.eq.s32.totalorder %s41, 5
      %p180 = por %p178, %p179
      %p182 = scmp.ne.s32.totalorder %s165, %s181
      %p183 = scmp.eq.s32.totalorder %s41, 0
      %p184 = por %p182, %p183
      %s185 = ssub.s32 %s43, %s50
      %p186 = scmp.eq.s32.totalorder %s185, 0
      %s188 = sadd.s32 %s187, 1
      %s189 = scalar_select %p186, %s187, %s188
      %p192 = pneg %p186
      %p193 = scmp.eq.s32.totalorder %s35, 5
      %p194 = por %p192, %p193
      %p195 = scmp.ne.s32.totalorder %s187, %s190
      %p196 = scmp.eq.s32.totalorder %s35, 0
      %p197 = por %p195, %p196
      %p198 = scmp.ne.s32.totalorder %s187, %s190
      %p199 = scmp.eq.s32.totalorder %s40, 5
      %p200 = por %p198, %p199
      %p201 = scmp.ne.s32.totalorder %s190, %s191
      %p202 = scmp.eq.s32.totalorder %s40, 0
      %p203 = por %p201, %p202
      %p204 = scmp.ne.s32.totalorder %s190, %s191
      %p205 = scmp.eq.s32.totalorder %s41, 5
      %p206 = por %p204, %p205
      %p208 = scmp.ne.s32.totalorder %s191, %s207
      %p209 = scmp.eq.s32.totalorder %s41, 0
      %p210 = por %p208, %p209
      %s211 = ssub.s32 %s43, %s50
      %p212 = scmp.eq.s32.totalorder %s211, 0
      %s214 = sadd.s32 %s213, 1
      %s215 = scalar_select %p212, %s213, %s214
      %p218 = pneg %p212
      %p219 = scmp.eq.s32.totalorder %s35, 5
      %p220 = por %p218, %p219
      %p221 = scmp.ne.s32.totalorder %s213, %s216
      %p222 = scmp.eq.s32.totalorder %s35, 0
      %p223 = por %p221, %p222
      %p224 = scmp.ne.s32.totalorder %s213, %s216
      %p225 = scmp.eq.s32.totalorder %s40, 5
      %p226 = por %p224, %p225
      %p227 = scmp.ne.s32.totalorder %s216, %s217
      %p228 = scmp.eq.s32.totalorder %s40, 0
      %p229 = por %p227, %p228
      %p230 = scmp.ne.s32.totalorder %s216, %s217
      %p231 = scmp.eq.s32.totalorder %s41, 5
      %p232 = por %p230, %p231
      %p234 = scmp.ne.s32.totalorder %s217, %s233
      %p235 = scmp.eq.s32.totalorder %s41, 0
      %p236 = por %p234, %p235
      %s237 = ssub.s32 %s43, %s50
      %p238 = scmp.eq.s32.totalorder %s237, 0
      %s240 = sadd.s32 %s239, 1
      %s241 = scalar_select %p238, %s239, %s240
      %p244 = pneg %p238
      %p245 = scmp.eq.s32.totalorder %s35, 5
      %p246 = por %p244, %p245
      %p247 = scmp.ne.s32.totalorder %s239, %s242
      %p248 = scmp.eq.s32.totalorder %s35, 0
      %p249 = por %p247, %p248
      %p250 = scmp.ne.s32.totalorder %s239, %s242
      %p251 = scmp.eq.s32.totalorder %s40, 5
      %p252 = por %p250, %p251
      %p253 = scmp.ne.s32.totalorder %s242, %s243
      %p254 = scmp.eq.s32.totalorder %s40, 0
      %p255 = por %p253, %p254
      %p256 = scmp.ne.s32.totalorder %s242, %s243
      %p257 = scmp.eq.s32.totalorder %s41, 5
      %p258 = por %p256, %p257
      %p260 = scmp.ne.s32.totalorder %s243, %s259
      %p261 = scmp.eq.s32.totalorder %s41, 0
      %p262 = por %p260, %p261
      %s263 = ssub.s32 %s43, %s50
      %p264 = scmp.eq.s32.totalorder %s263, 0
      %s266 = sadd.s32 %s265, 1
      %s267 = scalar_select %p264, %s265, %s266
      %p270 = pneg %p264
      %p271 = scmp.eq.s32.totalorder %s35, 5
      %p272 = por %p270, %p271
      %p273 = scmp.ne.s32.totalorder %s265, %s268
      %p274 = scmp.eq.s32.totalorder %s35, 0
      %p275 = por %p273, %p274
      %p276 = scmp.ne.s32.totalorder %s265, %s268
      %p277 = scmp.eq.s32.totalorder %s40, 5
      %p278 = por %p276, %p277
      %p279 = scmp.ne.s32.totalorder %s268, %s269
      %p280 = scmp.eq.s32.totalorder %s40, 0
      %p281 = por %p279, %p280
      %p282 = scmp.ne.s32.totalorder %s268, %s269
      %p283 = scmp.eq.s32.totalorder %s41, 5
      %p284 = por %p282, %p283
      %p286 = scmp.ne.s32.totalorder %s269, %s285
      %p287 = scmp.eq.s32.totalorder %s41, 0
      %p288 = por %p286, %p287
      %s289 = ssub.s32 %s43, %s50
      %p290 = scmp.eq.s32.totalorder %s289, 0
      %s292 = sadd.s32 %s291, 1
      %s293 = scalar_select %p290, %s291, %s292
      %p296 = pneg %p290
      %p297 = scmp.eq.s32.totalorder %s35, 5
      %p298 = por %p296, %p297
      %p299 = scmp.ne.s32.totalorder %s291, %s294
      %p300 = scmp.eq.s32.totalorder %s35, 0
      %p301 = por %p299, %p300
      %p302 = scmp.ne.s32.totalorder %s291, %s294
      %p303 = scmp.eq.s32.totalorder %s40, 5
      %p304 = por %p302, %p303
      %p305 = scmp.ne.s32.totalorder %s294, %s295
      %p306 = scmp.eq.s32.totalorder %s40, 0
      %p307 = por %p305, %p306
      %p308 = scmp.ne.s32.totalorder %s294, %s295
      %p309 = scmp.eq.s32.totalorder %s41, 5
      %p310 = por %p308, %p309
      %p312 = scmp.ne.s32.totalorder %s295, %s311
      %p313 = scmp.eq.s32.totalorder %s41, 0
      %p314 = por %p312, %p313
      %s315 = ssub.s32 %s43, %s50
      %p316 = scmp.eq.s32.totalorder %s315, 0
      %s318 = sadd.s32 %s317, 1
      %s319 = scalar_select %p316, %s317, %s318
      %p322 = pneg %p316
      %p323 = scmp.eq.s32.totalorder %s35, 5
      %p324 = por %p322, %p323
      %p325 = scmp.ne.s32.totalorder %s317, %s320
      %p326 = scmp.eq.s32.totalorder %s35, 0
      %p327 = por %p325, %p326
      %p328 = scmp.ne.s32.totalorder %s317, %s320
      %p329 = scmp.eq.s32.totalorder %s40, 5
      %p330 = por %p328, %p329
      %p331 = scmp.ne.s32.totalorder %s320, %s321
      %p332 = scmp.eq.s32.totalorder %s40, 0
      %p333 = por %p331, %p332
      %p334 = scmp.ne.s32.totalorder %s320, %s321
      %p335 = scmp.eq.s32.totalorder %s41, 5
      %p336 = por %p334, %p335
      %p338 = scmp.ne.s32.totalorder %s321, %s337
      %p339 = scmp.eq.s32.totalorder %s41, 0
      %p340 = por %p338, %p339
      %s341 = ssub.s32 %s43, %s50
      %p342 = scmp.eq.s32.totalorder %s341, 0
      %s344 = sadd.s32 %s343, 1
      %s345 = scalar_select %p342, %s343, %s344
      %p348 = pneg %p342
      %p349 = scmp.eq.s32.totalorder %s35, 5
      %p350 = por %p348, %p349
      %p351 = scmp.ne.s32.totalorder %s343, %s346
      %p352 = scmp.eq.s32.totalorder %s35, 0
      %p353 = por %p351, %p352
      %p354 = scmp.ne.s32.totalorder %s343, %s346
      %p355 = scmp.eq.s32.totalorder %s40, 5
      %p356 = por %p354, %p355
      %p357 = scmp.ne.s32.totalorder %s346, %s347
      %p358 = scmp.eq.s32.totalorder %s40, 0
      %p359 = por %p357, %p358
      %p360 = scmp.ne.s32.totalorder %s346, %s347
      %p361 = scmp.eq.s32.totalorder %s41, 5
      %p362 = por %p360, %p361
      %p364 = scmp.ne.s32.totalorder %s347, %s363
      %p365 = scmp.eq.s32.totalorder %s41, 0
      %p366 = por %p364, %p365
      %s367 = ssub.s32 %s42, %s54
      %p368 = scmp.eq.s32.totalorder %s367, 0
      %s370 = sadd.s32 %s369, 1
      %s371 = scalar_select %p368, %s369, %s370
      %p374 = pneg %p368
      %p375 = scmp.eq.s32.totalorder %s35, 5
      %p376 = por %p374, %p375
      %p377 = scmp.ne.s32.totalorder %s369, %s372
      %p378 = scmp.eq.s32.totalorder %s35, 0
      %p379 = por %p377, %p378
      %p380 = scmp.ne.s32.totalorder %s369, %s372
      %p381 = scmp.eq.s32.totalorder %s40, 5
      %p382 = por %p380, %p381
      %p383 = scmp.ne.s32.totalorder %s372, %s373
      %p384 = scmp.eq.s32.totalorder %s40, 0
      %p385 = por %p383, %p384
      %p386 = scmp.ne.s32.totalorder %s372, %s373
      %p387 = scmp.eq.s32.totalorder %s41, 5
      %p388 = por %p386, %p387
      %p390 = scmp.ne.s32.totalorder %s373, %s389
      %p391 = scmp.eq.s32.totalorder %s41, 0
      %p392 = por %p390, %p391
      %s393 = ssub.s32 %s42, %s54
      %p394 = scmp.eq.s32.totalorder %s393, 0
      %s396 = sadd.s32 %s395, 1
      %s397 = scalar_select %p394, %s395, %s396
      %p400 = pneg %p394
      %p401 = scmp.eq.s32.totalorder %s35, 5
      %p402 = por %p400, %p401
      %p403 = scmp.ne.s32.totalorder %s395, %s398
      %p404 = scmp.eq.s32.totalorder %s35, 0
      %p405 = por %p403, %p404
      %p406 = scmp.ne.s32.totalorder %s395, %s398
      %p407 = scmp.eq.s32.totalorder %s40, 5
      %p408 = por %p406, %p407
      %p409 = scmp.ne.s32.totalorder %s398, %s399
      %p410 = scmp.eq.s32.totalorder %s40, 0
      %p411 = por %p409, %p410
      %p412 = scmp.ne.s32.totalorder %s398, %s399
      %p413 = scmp.eq.s32.totalorder %s41, 5
      %p414 = por %p412, %p413
      %p416 = scmp.ne.s32.totalorder %s399, %s415
      %p417 = scmp.eq.s32.totalorder %s41, 0
      %p418 = por %p416, %p417
      %p419 = scmp.le.s32.totalorder 1, %s35
      %p420 = scmp.lt.s32.totalorder %s35, 7
      %p421 = pnand %p419, %p420
      %p422 = pneg %p421
      // Predicated region
      $region9: #{evmp_multilayer_forward.1} parent=5 // pred_check
        _
      $region10: #{evmp_multilayer_forward.1} parent=5 // pred_check_branch
        %424 = sbr.rel (%p421) target = $region12
      $region11: #{evmp_multilayer_forward.1} parent=5 // pred_region
        %s425 = ssub.s32 %s35, 1
      $region12: #{evmp_multilayer_forward.1} parent=5 // pred_fallthru
        _
      %p426 = scmp.lt.s32.totalorder %s35, 6
      // Predicated region
      $region13: #{evmp_multilayer_forward.1} parent=5 // pred_check
        %p427 = pneg %p426
      $region14: #{evmp_multilayer_forward.1} parent=5 // pred_check_branch
        %429 = sbr.rel (%p427) target = $region16
      $region15: #{evmp_multilayer_forward.1} parent=5 // pred_region
        // Predicated region
        $region17: #{evmp_multilayer_forward.1} parent=15 // pred_check
          %p430 = pneg %p67
        $region18: #{evmp_multilayer_forward.1} parent=15 // pred_check_branch
          %432 = sbr.rel (%p430) target = $region20
        $region19: #{evmp_multilayer_forward.1} parent=15 // pred_region
          %p433 = scmp.lt.s32.totalorder %s42, 1
          %s434 = scalar_select %p433, %s42, 1
          %s435 = smul.addr %s434, 8
          %s436 = scalar_lea.vmem %s0, %s435
        $region20: #{evmp_multilayer_forward.1} parent=15 // pred_fallthru
          _
        // Predicated region
        $region21: #{evmp_multilayer_forward.1} parent=15 // pred_check
          %p437 = pneg %p93
        $region22: #{evmp_multilayer_forward.1} parent=15 // pred_check_branch
          %439 = sbr.rel (%p437) target = $region24
        $region23: #{evmp_multilayer_forward.1} parent=15 // pred_region
          %p440 = scmp.lt.s32.totalorder %s42, 1
          %s441 = scalar_select %p440, %s42, 1
          %s442 = smul.addr %s441, 8
          %s443 = smul.addr %s442, 8
          %s444 = scalar_lea.vmem %s1, %s443
        $region24: #{evmp_multilayer_forward.1} parent=15 // pred_fallthru
          _
        // Predicated region
        $region25: #{evmp_multilayer_forward.1} parent=15 // pred_check
          %p445 = pneg %p119
        $region26: #{evmp_multilayer_forward.1} parent=15 // pred_check_branch
          %447 = sbr.rel (%p445) target = $region28
        $region27: #{evmp_multilayer_forward.1} parent=15 // pred_region
          %p448 = scmp.lt.s32.totalorder %s42, 1
          %s449 = scalar_select %p448, %s42, 1
          %s450 = smul.addr %s449, 8
          %s451 = scalar_lea.vmem %s2, %s450
        $region28: #{evmp_multilayer_forward.1} parent=15 // pred_fallthru
          _
        // Predicated region
        $region29: #{evmp_multilayer_forward.1} parent=15 // pred_check
          %p452 = pneg %p145
        $region30: #{evmp_multilayer_forward.1} parent=15 // pred_check_branch
          %454 = sbr.rel (%p452) target = $region32
        $region31: #{evmp_multilayer_forward.1} parent=15 // pred_region
          %p455 = scmp.lt.s32.totalorder %s42, 1
          %s456 = scalar_select %p455, %s42, 1
          %s457 = smul.addr %s456, 8
          %s458 = smul.addr %s457, 8
          %s459 = scalar_lea.vmem %s3, %s458
        $region32: #{evmp_multilayer_forward.1} parent=15 // pred_fallthru
          _
        // Predicated region
        $region33: #{evmp_multilayer_forward.1} parent=15 // pred_check
          %p460 = pneg %p171
        $region34: #{evmp_multilayer_forward.1} parent=15 // pred_check_branch
          %462 = sbr.rel (%p460) target = $region36
        $region35: #{evmp_multilayer_forward.1} parent=15 // pred_region
          %s463 = sand.u32 %s161, 1
          %s464 = scalar_lea.sflag [#allocation6], %s463
          %s465 = sand.u32 %s161, 1
          %s466 = smul.addr %s465, 32
          %s467 = scalar_lea.vmem [#allocation5], %s466
          %469 = vsyncadd %s464, 0
          %s470 = smul.addr %s43, 4
          %s471 = smul.addr %s470, 8
          %s472 = scalar_lea.hbm %s4, %s471
          %s473 = sshll.u32 %s472, 4
          %s474 = int_to_ptr.hbm [resolvable:$true] %s473
          %s475 = sshll.u32 %s467, 4
          %s476 = int_to_ptr.vmem [resolvable:$true] %s475
          %481 = dma.hbm_to_vmem [thread:$0]  %s474, 512, %s476, %s464, 128, 128, 8
        $region36: #{evmp_multilayer_forward.1} parent=15 // pred_fallthru
          _
        // Predicated region
        $region37: #{evmp_multilayer_forward.1} parent=15 // pred_check
          %p482 = pneg %p197
        $region38: #{evmp_multilayer_forward.1} parent=15 // pred_check_branch
          %484 = sbr.rel (%p482) target = $region40
        $region39: #{evmp_multilayer_forward.1} parent=15 // pred_region
          %s485 = sand.u32 %s35, 1
          %s486 = scalar_lea.sflag [#allocation9], %s485
          %s487 = sand.u32 %s187, 1
          %s488 = smul.addr %s487, 32
          %s489 = scalar_lea.vmem [#allocation8], %s488
          %491 = vsyncadd %s486, 0
          %s492 = smul.addr %s43, 4
          %s493 = smul.addr %s492, 8
          %s494 = scalar_lea.hbm %s5, %s493
          %s495 = sshll.u32 %s494, 4
          %s496 = int_to_ptr.hbm [resolvable:$true] %s495
          %s497 = sshll.u32 %s489, 4
          %s498 = int_to_ptr.vmem [resolvable:$true] %s497
          %503 = dma.hbm_to_vmem [thread:$0]  %s496, 512, %s498, %s486, 128, 128, 8
        $region40: #{evmp_multilayer_forward.1} parent=15 // pred_fallthru
          _
        // Predicated region
        $region41: #{evmp_multilayer_forward.1} parent=15 // pred_check
          %p504 = pneg %p223
        $region42: #{evmp_multilayer_forward.1} parent=15 // pred_check_branch
          %506 = sbr.rel (%p504) target = $region44
        $region43: #{evmp_multilayer_forward.1} parent=15 // pred_region
          %p507 = scmp.lt.s32.totalorder %s43, 2
          %s508 = scalar_select %p507, %s43, 2
          %s509 = scalar_lea.vmem %s6, %s508
        $region44: #{evmp_multilayer_forward.1} parent=15 // pred_fallthru
          _
        // Predicated region
        $region45: #{evmp_multilayer_forward.1} parent=15 // pred_check
          %p510 = pneg %p249
        $region46: #{evmp_multilayer_forward.1} parent=15 // pred_check_branch
          %512 = sbr.rel (%p510) target = $region48
        $region47: #{evmp_multilayer_forward.1} parent=15 // pred_region
          %p513 = scmp.lt.s32.totalorder %s43, 2
          %s514 = scalar_select %p513, %s43, 2
          %s515 = scalar_lea.vmem %s7, %s514
        $region48: #{evmp_multilayer_forward.1} parent=15 // pred_fallthru
          _
        // Predicated region
        $region49: #{evmp_multilayer_forward.1} parent=15 // pred_check
          %p516 = pneg %p275
        $region50: #{evmp_multilayer_forward.1} parent=15 // pred_check_branch
          %518 = sbr.rel (%p516) target = $region52
        $region51: #{evmp_multilayer_forward.1} parent=15 // pred_region
          %s519 = sand.u32 %s35, 1
          %s520 = scalar_lea.sflag [#allocation9], %s519
          %s521 = sand.u32 %s265, 1
          %s522 = smul.addr %s521, 32
          %s523 = scalar_lea.vmem [#allocation10], %s522
          %525 = vsyncadd %s520, 0
          %s526 = smul.addr %s43, 4
          %s527 = smul.addr %s526, 8
          %s528 = scalar_lea.hbm %s8, %s527
          %s529 = sshll.u32 %s528, 4
          %s530 = int_to_ptr.hbm [resolvable:$true] %s529
          %s531 = sshll.u32 %s523, 4
          %s532 = int_to_ptr.vmem [resolvable:$true] %s531
          %537 = dma.hbm_to_vmem [thread:$0]  %s530, 512, %s532, %s520, 128, 128, 8
        $region52: #{evmp_multilayer_forward.1} parent=15 // pred_fallthru
          _
        // Predicated region
        $region53: #{evmp_multilayer_forward.1} parent=15 // pred_check
          %p538 = pneg %p301
        $region54: #{evmp_multilayer_forward.1} parent=15 // pred_check_branch
          %540 = sbr.rel (%p538) target = $region56
        $region55: #{evmp_multilayer_forward.1} parent=15 // pred_region
          %s541 = sand.u32 %s291, 1
          %s542 = scalar_lea.sflag [#allocation12], %s541
          %s543 = sand.u32 %s291, 1
          %s544 = smul.addr %s543, 32
          %s545 = scalar_lea.vmem [#allocation11], %s544
          %547 = vsyncadd %s542, 0
          %s548 = smul.addr %s43, 4
          %s549 = smul.addr %s548, 8
          %s550 = scalar_lea.hbm %s9, %s549
          %s551 = sshll.u32 %s550, 4
          %s552 = int_to_ptr.hbm [resolvable:$true] %s551
          %s553 = sshll.u32 %s545, 4
          %s554 = int_to_ptr.vmem [resolvable:$true] %s553
          %559 = dma.hbm_to_vmem [thread:$0]  %s552, 512, %s554, %s542, 128, 128, 8
        $region56: #{evmp_multilayer_forward.1} parent=15 // pred_fallthru
          _
        // Predicated region
        $region57: #{evmp_multilayer_forward.1} parent=15 // pred_check
          %p560 = pneg %p327
        $region58: #{evmp_multilayer_forward.1} parent=15 // pred_check_branch
          %562 = sbr.rel (%p560) target = $region60
        $region59: #{evmp_multilayer_forward.1} parent=15 // pred_region
          %p563 = scmp.lt.s32.totalorder %s43, 2
          %s564 = scalar_select %p563, %s43, 2
          %s565 = scalar_lea.vmem %s10, %s564
        $region60: #{evmp_multilayer_forward.1} parent=15 // pred_fallthru
          _
        // Predicated region
        $region61: #{evmp_multilayer_forward.1} parent=15 // pred_check
          %p566 = pneg %p353
        $region62: #{evmp_multilayer_forward.1} parent=15 // pred_check_branch
          %568 = sbr.rel (%p566) target = $region64
        $region63: #{evmp_multilayer_forward.1} parent=15 // pred_region
          %p569 = scmp.lt.s32.totalorder %s43, 2
          %s570 = scalar_select %p569, %s43, 2
          %s571 = scalar_lea.vmem %s11, %s570
        $region64: #{evmp_multilayer_forward.1} parent=15 // pred_fallthru
          _
      $region16: #{evmp_multilayer_forward.1} parent=5 // pred_fallthru
        _
      %p572 = scmp.le.s32.totalorder 1, %s35
      %p573 = scmp.lt.s32.totalorder %s35, 7
      %p574 = pnand %p572, %p573
      %p575 = pneg %p574
      // Predicated region
      $region65: #{evmp_multilayer_forward.1} parent=5 // pred_check
        _
      $region66: #{evmp_multilayer_forward.1} parent=5 // pred_check_branch
        %577 = sbr.rel (%p574) target = $region68
      $region67: #{evmp_multilayer_forward.1} parent=5 // pred_region
        %s578 = ssub.s32 %s35, 1
        %s579 = sand.u32 %s164, 1
        %s580 = scalar_lea.sflag [#allocation6], %s579
        %s581 = sand.u32 %s164, 1
        %s582 = smul.addr %s581, 32
        %s583 = scalar_lea.vmem [#allocation5], %s582
        // Predicated region
        $region69: #{evmp_multilayer_forward.1} parent=67 // pred_check
          %p584 = pneg %p177
        $region70: #{evmp_multilayer_forward.1} parent=67 // pred_check_branch
          %586 = sbr.rel (%p584) target = $region72
        $region71: #{evmp_multilayer_forward.1} parent=67 // pred_region
          %588 = dma.done %s580, 512
        $region72: #{evmp_multilayer_forward.1} parent=67 // pred_fallthru
          _
        %s589 = sand.u32 %s40, 1
        %s590 = scalar_lea.sflag [#allocation9], %s589
        %s591 = sand.u32 %s190, 1
        %s592 = smul.addr %s591, 32
        %s593 = scalar_lea.vmem [#allocation8], %s592
        // Predicated region
        $region73: #{evmp_multilayer_forward.1} parent=67 // pred_check
          %p594 = pneg %p203
        $region74: #{evmp_multilayer_forward.1} parent=67 // pred_check_branch
          %596 = sbr.rel (%p594) target = $region76
        $region75: #{evmp_multilayer_forward.1} parent=67 // pred_region
          %598 = dma.done %s590, 512
        $region76: #{evmp_multilayer_forward.1} parent=67 // pred_fallthru
          _
        %s599 = sand.u32 %s40, 1
        %s600 = scalar_lea.sflag [#allocation9], %s599
        %s601 = sand.u32 %s268, 1
        %s602 = smul.addr %s601, 32
        %s603 = scalar_lea.vmem [#allocation10], %s602
        // Predicated region
        $region77: #{evmp_multilayer_forward.1} parent=67 // pred_check
          %p604 = pneg %p281
        $region78: #{evmp_multilayer_forward.1} parent=67 // pred_check_branch
          %606 = sbr.rel (%p604) target = $region80
        $region79: #{evmp_multilayer_forward.1} parent=67 // pred_region
          %608 = dma.done %s600, 512
        $region80: #{evmp_multilayer_forward.1} parent=67 // pred_fallthru
          _
        %s609 = sand.u32 %s294, 1
        %s610 = scalar_lea.sflag [#allocation12], %s609
        %s611 = sand.u32 %s294, 1
        %s612 = smul.addr %s611, 32
        %s613 = scalar_lea.vmem [#allocation11], %s612
        // Predicated region
        $region81: #{evmp_multilayer_forward.1} parent=67 // pred_check
          %p614 = pneg %p307
        $region82: #{evmp_multilayer_forward.1} parent=67 // pred_check_branch
          %616 = sbr.rel (%p614) target = $region84
        $region83: #{evmp_multilayer_forward.1} parent=67 // pred_region
          %618 = dma.done %s610, 512
        $region84: #{evmp_multilayer_forward.1} parent=67 // pred_fallthru
          _
        %p619 = scmp.lt.s32.totalorder %s44, 1
        %s620 = scalar_select %p619, %s44, 1
        %s621 = smul.addr %s620, 8
        %s622 = scalar_lea.vmem %s0, %s621
        %p623 = pneg %p73
        %p624 = pneg %p70
        %p625 = scmp.lt.s32.totalorder %s44, 1
        %s626 = scalar_select %p625, %s44, 1
        %s627 = smul.addr %s626, 8
        %s628 = smul.addr %s627, 8
        %s629 = scalar_lea.vmem %s1, %s628
        %p630 = pneg %p99
        %p631 = pneg %p96
        %p632 = scmp.lt.s32.totalorder %s44, 1
        %s633 = scalar_select %p632, %s44, 1
        %s634 = smul.addr %s633, 8
        %s635 = scalar_lea.vmem %s2, %s634
        %p636 = pneg %p125
        %p637 = pneg %p122
        %p638 = scmp.lt.s32.totalorder %s44, 1
        %s639 = scalar_select %p638, %s44, 1
        %s640 = smul.addr %s639, 8
        %s641 = smul.addr %s640, 8
        %s642 = scalar_lea.vmem %s3, %s641
        %p643 = pneg %p151
        %p644 = pneg %p148
        %s645 = sand.u32 %s164, 1
        %s646 = scalar_lea.sflag [#allocation6], %s645
        %s647 = sand.u32 %s164, 1
        %s648 = smul.addr %s647, 32
        %s649 = scalar_lea.vmem [#allocation5], %s648
        %p650 = pneg %p177
        %p651 = pneg %p174
        %s652 = sand.u32 %s40, 1
        %s653 = scalar_lea.sflag [#allocation9], %s652
        %s654 = sand.u32 %s190, 1
        %s655 = smul.addr %s654, 32
        %s656 = scalar_lea.vmem [#allocation8], %s655
        %p657 = pneg %p203
        %p658 = pneg %p200
        %p659 = scmp.lt.s32.totalorder %s45, 2
        %s660 = scalar_select %p659, %s45, 2
        %s661 = scalar_lea.vmem %s6, %s660
        %p662 = pneg %p229
        %p663 = pneg %p226
        %p664 = scmp.lt.s32.totalorder %s45, 2
        %s665 = scalar_select %p664, %s45, 2
        %s666 = scalar_lea.vmem %s7, %s665
        %p667 = pneg %p255
        %p668 = pneg %p252
        %s669 = sand.u32 %s40, 1
        %s670 = scalar_lea.sflag [#allocation9], %s669
        %s671 = sand.u32 %s268, 1
        %s672 = smul.addr %s671, 32
        %s673 = scalar_lea.vmem [#allocation10], %s672
        %p674 = pneg %p281
        %p675 = pneg %p278
        %s676 = sand.u32 %s294, 1
        %s677 = scalar_lea.sflag [#allocation12], %s676
        %s678 = sand.u32 %s294, 1
        %s679 = smul.addr %s678, 32
        %s680 = scalar_lea.vmem [#allocation11], %s679
        %p681 = pneg %p307
        %p682 = pneg %p304
        %p683 = scmp.lt.s32.totalorder %s45, 2
        %s684 = scalar_select %p683, %s45, 2
        %s685 = scalar_lea.vmem %s10, %s684
        %p686 = pneg %p333
        %p687 = pneg %p330
        %p688 = scmp.lt.s32.totalorder %s45, 2
        %s689 = scalar_select %p688, %s45, 2
        %s690 = scalar_lea.vmem %s11, %s689
        %p691 = pneg %p359
        %p692 = pneg %p356
        %p693 = pneg %p385
        %p694 = pneg %p382
        %s695 = sand.u32 %s372, 1
        %s696 = scalar_lea.sflag [#allocation7], %s695
        %s697 = sand.u32 %s372, 1
        %s698 = smul.addr %s697, 64
        %s699 = scalar_lea.vmem [#allocation13], %s698
        %p700 = pneg %p411
        %p701 = pneg %p408
        %s702 = sand.u32 %s398, 1
        %s703 = scalar_lea.sflag [#allocation15], %s702
        %s704 = sand.u32 %s398, 1
        %s705 = smul.addr %s704, 8
        %s706 = scalar_lea.vmem [#allocation14], %s705
        %p707 = scmp.lt.s32.totalorder %s44, 1
        %s708 = scalar_select %p707, %s44, 1
        %s709 = smul.addr %s708, 8
        %s710 = scalar_lea.vmem %s0, %s709
        %p711 = scmp.lt.s32.totalorder %s44, 1
        %s712 = scalar_select %p711, %s44, 1
        %s713 = smul.addr %s712, 8
        %s714 = smul.addr %s713, 8
        %s715 = scalar_lea.vmem %s1, %s714
        %p716 = scmp.lt.s32.totalorder %s44, 1
        %s717 = scalar_select %p716, %s44, 1
        %s718 = smul.addr %s717, 8
        %s719 = scalar_lea.vmem %s2, %s718
        %p720 = scmp.lt.s32.totalorder %s44, 1
        %s721 = scalar_select %p720, %s44, 1
        %s722 = smul.addr %s721, 8
        %s723 = smul.addr %s722, 8
        %s724 = scalar_lea.vmem %s3, %s723
        %p725 = scmp.lt.s32.totalorder %s45, 2
        %s726 = scalar_select %p725, %s45, 2
        %s727 = scalar_lea.vmem %s6, %s726
        %p728 = scmp.lt.s32.totalorder %s45, 2
        %s729 = scalar_select %p728, %s45, 2
        %s730 = scalar_lea.vmem %s7, %s729
        %p731 = scmp.lt.s32.totalorder %s45, 2
        %s732 = scalar_select %p731, %s45, 2
        %s733 = scalar_lea.vmem %s10, %s732
        %p734 = scmp.lt.s32.totalorder %s45, 2
        %s735 = scalar_select %p734, %s45, 2
        %s736 = scalar_lea.vmem %s11, %s735
        %p737 = scmp.eq.s32.totalorder %s45, 0
        // Predicated region
        $region85: #{evmp_multilayer_forward.1} parent=67 // pred_check
          %p738 = pneg %p737
        $region86: #{evmp_multilayer_forward.1} parent=67 // pred_check_branch
          %740 = sbr.rel (%p738) target = $region88
        $region87: #{evmp_multilayer_forward.1} parent=67 // pred_region
          %v741 = vld [vmem:[%s710] sm:$0xff]
          %vm742 = vcmask 261120
          %743 = vst.msk [vmem:[#allocation2] sm:$0xff] %vm742, %v741
          %v744 = vld [vmem:[%s715] sm:$0xff]
          %v745 = vld [vmem:[%s715 + $0x8] sm:$0xff]
          %v746 = vld [vmem:[%s715 + $0x10] sm:$0xff]
          %v747 = vld [vmem:[%s715 + $0x18] sm:$0xff]
          %v748 = vld [vmem:[%s715 + $0x20] sm:$0xff]
          %v749 = vld [vmem:[%s715 + $0x28] sm:$0xff]
          %v750 = vld [vmem:[%s715 + $0x30] sm:$0xff]
          %v751 = vld [vmem:[%s715 + $0x38] sm:$0xff]
          %752 = vst.msk [vmem:[#allocation3] sm:$0xff] %vm742, %v744
          %753 = vst.msk [vmem:[#allocation3 + $0x8] sm:$0xff] %vm742, %v745
          %754 = vst.msk [vmem:[#allocation3 + $0x10] sm:$0xff] %vm742, %v746
          %755 = vst.msk [vmem:[#allocation3 + $0x18] sm:$0xff] %vm742, %v747
          %756 = vst.msk [vmem:[#allocation3 + $0x20] sm:$0xff] %vm742, %v748
          %757 = vst.msk [vmem:[#allocation3 + $0x28] sm:$0xff] %vm742, %v749
          %758 = vst.msk [vmem:[#allocation3 + $0x30] sm:$0xff] %vm742, %v750
          %759 = vst.msk [vmem:[#allocation3 + $0x38] sm:$0xff] %vm742, %v751
          %760 = vst.msk [vmem:[#allocation4] sm:$0xff] %vm742, 0.0
        $region88: #{evmp_multilayer_forward.1} parent=67 // pred_fallthru
          _
        %v761 = vld [vmem:[#allocation4] sm:$0xff]
        %v762 = vld [vmem:[#allocation2] sm:$0xff]
        %v763 = vld [vmem:[%s583] sm:$0xff]
        %v764 = vld [vmem:[%s583 + $0x8] sm:$0xff]
        %v765 = vld [vmem:[%s583 + $0x10] sm:$0xff]
        %v766 = vld [vmem:[%s583 + $0x18] sm:$0xff]
        %v767 = vld [vmem:[%s593] sm:$0xff]
        %v768 = vld [vmem:[%s593 + $0x8] sm:$0xff]
        %v769 = vld [vmem:[%s593 + $0x10] sm:$0xff]
        %v770 = vld [vmem:[%s593 + $0x18] sm:$0xff]
        %v771 = vld [vmem:[%s727] sm:$0x1]
        %v772 = vld [vmem:[%s730] sm:$0x1]
        %v774 = vperm.slane %v771, 0
        %vm776 = vcmask 261120
        %v778 = vsel %vm776, %v761, 0
        %780 = vmatpush.msra.mxu0 0.0
        %781 = vmatpush.msra.mxu0 0.0
        %782 = vmatpush.msra.mxu0 0.0
        %783 = vmatpush.msra.mxu0 0.0
        %784 = vmatpush.msra.mxu0 0.0
        %785 = vmatpush.msra.mxu0 0.0
        %786 = vmatpush.msra.mxu0 0.0
        %787 = vmatpush.msra.mxu0 0.0
        %788 = vmatpush.msra.mxu0 0.0
        %789 = vmatpush.msra.mxu0 0.0
        %790 = vmatpush.msra.mxu0 0.0
        %791 = vmatpush.msra.mxu0 0.0
        %792 = vmatpush.msra.mxu0 %v766
        %793 = vmatpush.msra.mxu0 %v765
        %794 = vmatpush.msra.mxu0 %v764
        %795 = vmatpush.msra.mxu0 %v763
        %796 = vmatmul.f32.gmra.mxu0 %v778
        %v797 = vpop.f32.mrf.mxu0
        %v798 = vadd.f32 %v774, %v797
        %799 = vdwg.mxu0
        %v801 = vperm.slane %v772, 0
        %v804 = vsel %vm776, %v762, 0
        %806 = vmatpush.msra.mxu0 0.0
        %807 = vmatpush.msra.mxu0 0.0
        %808 = vmatpush.msra.mxu0 0.0
        %809 = vmatpush.msra.mxu0 0.0
        %810 = vmatpush.msra.mxu0 0.0
        %811 = vmatpush.msra.mxu0 0.0
        %812 = vmatpush.msra.mxu0 0.0
        %813 = vmatpush.msra.mxu0 0.0
        %814 = vmatpush.msra.mxu0 0.0
        %815 = vmatpush.msra.mxu0 0.0
        %816 = vmatpush.msra.mxu0 0.0
        %817 = vmatpush.msra.mxu0 0.0
        %818 = vmatpush.msra.mxu0 %v770
        %819 = vmatpush.msra.mxu0 %v769
        %820 = vmatpush.msra.mxu0 %v768
        %821 = vmatpush.msra.mxu0 %v767
        %822 = vmatmul.f32.gmra.mxu0 %v804
        %v823 = vpop.f32.mrf.mxu0
        %v824 = vadd.f32 %v801, %v823
        %825 = vdwg.mxu0
        %v826 = vadd.f32 %v798, %v824
        %v827 = vxor.u32 %v826, 2147483648
        %v828 = vmul.f32 %v827, 1.442695
        %v829 = vpow.pop %v828
        %v830 = vadd.f32 %v829, 1.0
        %v831 = vrcp.pop %v830
        %v832 = vmul.f32 %v830, %v831
        %v833 = vsub.f32 1.0, %v832
        %v834 = vmul.f32 %v831, %v833
        %v835 = vadd.f32 %v831, %v834
        %vm836 = vweird.f32 %v830
        %vm837 = vweird.f32 %v831
        %vm838 = vmor %vm836, %vm837
        %v839 = vsel %vm838, %v831, %v835
        %v840 = vand.u32 2147483647, %v830
        %vm841 = vcmp.eq.f32.partialorder %v840, 8.507059e+37
        %v842 = vand.u32 %v830, 2147483648
        %v843 = vor.u32 1.1754944e-38, %v842
        %v844 = vsel %vm841, %v843, %v839
        %v845 = vmul.f32 1.0, %v844
        %847 = vrot.lane.b32.xlu0 %v824, 64
        %v848 = vpop.permute.xlu0 %847
        %v850 = vmul.f32 %v845, %v848
        %852 = vrot.lane.b32.xlu0 %v850, 64
        %v853 = vpop.permute.xlu0 %852
        %v855 = vadd.f32 %v798, %v853
        %v856 = vtanh.pop %v855
        %v857 = vsub.f32 1.0, %v845
        %859 = vrot.lane.b32.xlu0 %v856, 96
        %v860 = vpop.permute.xlu0 %859
        %v862 = vmul.f32 %v857, %v860
        %863 = vrot.lane.b32.xlu0 %v762, 32
        %v864 = vpop.permute.xlu0 %863
        %v866 = vmul.f32 %v845, %v864
        %v867 = vadd.f32 %v862, %v866
        %869 = vrot.lane.b32.xlu0 %v867, 96
        %v870 = vpop.permute.xlu0 %869
        %872 = vst.msk [vmem:[#allocation2] sm:$0xff] %vm776, %v870
        %v873 = vld [vmem:[%s719] sm:$0xff]
        %875 = vset.pattern.permute.xlu0 0
        %876 = vperm.xlu0 %875, %v873
        %v877 = vpop.permute.xlu0 %876
        %v879 = vmul.f32 %v867, %v877
        %v880 = vperm.slane %v879, 0
        %v881 = vmul.f32 %v879, %v880
        %v882 = vperm.slane %v879, 1
        %v883 = vmul.f32 %v879, %v882
        %v884 = vperm.slane %v879, 2
        %v885 = vmul.f32 %v879, %v884
        %v886 = vperm.slane %v879, 3
        %v887 = vmul.f32 %v879, %v886
        %v888 = vperm.slane %v879, 4
        %v889 = vmul.f32 %v879, %v888
        %v890 = vperm.slane %v879, 5
        %v891 = vmul.f32 %v879, %v890
        %v892 = vperm.slane %v879, 6
        %v893 = vmul.f32 %v879, %v892
        %v894 = vperm.slane %v879, 7
        %v895 = vmul.f32 %v879, %v894
        %v896 = vld [vmem:[#allocation3] sm:$0xff]
        %v897 = vld [vmem:[#allocation3 + $0x8] sm:$0xff]
        %v898 = vld [vmem:[#allocation3 + $0x10] sm:$0xff]
        %v899 = vld [vmem:[#allocation3 + $0x18] sm:$0xff]
        %v900 = vld [vmem:[#allocation3 + $0x20] sm:$0xff]
        %v901 = vld [vmem:[#allocation3 + $0x28] sm:$0xff]
        %v902 = vld [vmem:[#allocation3 + $0x30] sm:$0xff]
        %v903 = vld [vmem:[#allocation3 + $0x38] sm:$0xff]
        %v904 = vld [vmem:[%s603] sm:$0xff]
        %v905 = vld [vmem:[%s603 + $0x8] sm:$0xff]
        %v906 = vld [vmem:[%s603 + $0x10] sm:$0xff]
        %v907 = vld [vmem:[%s603 + $0x18] sm:$0xff]
        %v908 = vld [vmem:[%s613] sm:$0xff]
        %v909 = vld [vmem:[%s613 + $0x8] sm:$0xff]
        %v910 = vld [vmem:[%s613 + $0x10] sm:$0xff]
        %v911 = vld [vmem:[%s613 + $0x18] sm:$0xff]
        %v912 = vld [vmem:[%s733] sm:$0x1]
        %v913 = vld [vmem:[%s736] sm:$0x1]
        %v915 = vperm.slane %v912, 0
        %925 = vrot.lane.b32.xlu0 %v881, 96
        %v926 = vpop.permute.xlu0 %925
        %927 = vrot.lane.b32.xlu0 %v883, 96
        %v928 = vpop.permute.xlu0 %927
        %929 = vrot.lane.b32.xlu0 %v885, 96
        %v930 = vpop.permute.xlu0 %929
        %931 = vrot.lane.b32.xlu0 %v887, 96
        %v932 = vpop.permute.xlu0 %931
        %933 = vrot.lane.b32.xlu0 %v889, 96
        %v934 = vpop.permute.xlu0 %933
        %935 = vrot.lane.b32.xlu0 %v891, 96
        %v936 = vpop.permute.xlu0 %935
        %937 = vrot.lane.b32.xlu0 %v893, 96
        %v938 = vpop.permute.xlu0 %937
        %939 = vrot.lane.b32.xlu0 %v895, 96
        %v940 = vpop.permute.xlu0 %939
        %v941 = vsel %vm776, %v926, 0
        %v943 = vsel %vm776, %v928, 0
        %v945 = vsel %vm776, %v930, 0
        %v947 = vsel %vm776, %v932, 0
        %v949 = vsel %vm776, %v934, 0
        %v951 = vsel %vm776, %v936, 0
        %v953 = vsel %vm776, %v938, 0
        %v955 = vsel %vm776, %v940, 0
        %957 = vmatpush.msra.mxu0 0.0
        %958 = vmatpush.msra.mxu0 0.0
        %959 = vmatpush.msra.mxu0 0.0
        %960 = vmatpush.msra.mxu0 0.0
        %961 = vmatpush.msra.mxu0 0.0
        %962 = vmatpush.msra.mxu0 0.0
        %963 = vmatpush.msra.mxu0 0.0
        %964 = vmatpush.msra.mxu0 0.0
        %965 = vmatpush.msra.mxu0 0.0
        %966 = vmatpush.msra.mxu0 0.0
        %967 = vmatpush.msra.mxu0 0.0
        %968 = vmatpush.msra.mxu0 0.0
        %969 = vmatpush.msra.mxu0 %v907
        %970 = vmatpush.msra.mxu0 %v906
        %971 = vmatpush.msra.mxu0 %v905
        %972 = vmatpush.msra.mxu0 %v904
        %973 = vmatmul.f32.gmra.mxu0 %v941
        %v974 = vpop.f32.mrf.mxu0
        %v975 = vadd.f32 %v915, %v974
        %976 = vmatmul.f32.gmra.mxu0 %v943
        %v977 = vpop.f32.mrf.mxu0
        %v978 = vadd.f32 %v915, %v977
        %979 = vmatmul.f32.gmra.mxu0 %v945
        %v980 = vpop.f32.mrf.mxu0
        %v981 = vadd.f32 %v915, %v980
        %982 = vmatmul.f32.gmra.mxu0 %v947
        %v983 = vpop.f32.mrf.mxu0
        %v984 = vadd.f32 %v915, %v983
        %985 = vmatmul.f32.gmra.mxu0 %v949
        %v986 = vpop.f32.mrf.mxu0
        %v987 = vadd.f32 %v915, %v986
        %988 = vmatmul.f32.gmra.mxu0 %v951
        %v989 = vpop.f32.mrf.mxu0
        %v990 = vadd.f32 %v915, %v989
        %991 = vmatmul.f32.gmra.mxu0 %v953
        %v992 = vpop.f32.mrf.mxu0
        %v993 = vadd.f32 %v915, %v992
        %994 = vmatmul.f32.gmra.mxu0 %v955
        %v995 = vpop.f32.mrf.mxu0
        %v996 = vadd.f32 %v915, %v995
        %997 = vdwg.mxu0
        %v999 = vperm.slane %v913, 0
        %v1002 = vsel %vm776, %v896, 0
        %v1005 = vsel %vm776, %v897, 0
        %v1008 = vsel %vm776, %v898, 0
        %v1011 = vsel %vm776, %v899, 0
        %v1014 = vsel %vm776, %v900, 0
        %v1017 = vsel %vm776, %v901, 0
        %v1020 = vsel %vm776, %v902, 0
        %v1023 = vsel %vm776, %v903, 0
        %1025 = vmatpush.msra.mxu0 0.0
        %1026 = vmatpush.msra.mxu0 0.0
        %1027 = vmatpush.msra.mxu0 0.0
        %1028 = vmatpush.msra.mxu0 0.0
        %1029 = vmatpush.msra.mxu0 0.0
        %1030 = vmatpush.msra.mxu0 0.0
        %1031 = vmatpush.msra.mxu0 0.0
        %1032 = vmatpush.msra.mxu0 0.0
        %1033 = vmatpush.msra.mxu0 0.0
        %1034 = vmatpush.msra.mxu0 0.0
        %1035 = vmatpush.msra.mxu0 0.0
        %1036 = vmatpush.msra.mxu0 0.0
        %1037 = vmatpush.msra.mxu0 %v911
        %1038 = vmatpush.msra.mxu0 %v910
        %1039 = vmatpush.msra.mxu0 %v909
        %1040 = vmatpush.msra.mxu0 %v908
        %1041 = vmatmul.f32.gmra.mxu0 %v1002
        %v1042 = vpop.f32.mrf.mxu0
        %v1043 = vadd.f32 %v999, %v1042
        %1044 = vmatmul.f32.gmra.mxu0 %v1005
        %v1045 = vpop.f32.mrf.mxu0
        %v1046 = vadd.f32 %v999, %v1045
        %1047 = vmatmul.f32.gmra.mxu0 %v1008
        %v1048 = vpop.f32.mrf.mxu0
        %v1049 = vadd.f32 %v999, %v1048
        %1050 = vmatmul.f32.gmra.mxu0 %v1011
        %v1051 = vpop.f32.mrf.mxu0
        %v1052 = vadd.f32 %v999, %v1051
        %1053 = vmatmul.f32.gmra.mxu0 %v1014
        %v1054 = vpop.f32.mrf.mxu0
        %v1055 = vadd.f32 %v999, %v1054
        %1056 = vmatmul.f32.gmra.mxu0 %v1017
        %v1057 = vpop.f32.mrf.mxu0
        %v1058 = vadd.f32 %v999, %v1057
        %1059 = vmatmul.f32.gmra.mxu0 %v1020
        %v1060 = vpop.f32.mrf.mxu0
        %v1061 = vadd.f32 %v999, %v1060
        %1062 = vmatmul.f32.gmra.mxu0 %v1023
        %v1063 = vpop.f32.mrf.mxu0
        %v1064 = vadd.f32 %v999, %v1063
        %1065 = vdwg.mxu0
        %v1066 = vadd.f32 %v975, %v1043
        %v1067 = vadd.f32 %v978, %v1046
        %v1068 = vadd.f32 %v981, %v1049
        %v1069 = vadd.f32 %v984, %v1052
        %v1070 = vadd.f32 %v987, %v1055
        %v1071 = vadd.f32 %v990, %v1058
        %v1072 = vadd.f32 %v993, %v1061
        %v1073 = vadd.f32 %v996, %v1064
        %v1074 = vxor.u32 %v1066, 2147483648
        %v1075 = vxor.u32 %v1067, 2147483648
        %v1076 = vxor.u32 %v1068, 2147483648
        %v1077 = vxor.u32 %v1069, 2147483648
        %v1078 = vxor.u32 %v1070, 2147483648
        %v1079 = vxor.u32 %v1071, 2147483648
        %v1080 = vxor.u32 %v1072, 2147483648
        %v1081 = vxor.u32 %v1073, 2147483648
        %v1082 = vmul.f32 %v1074, 1.442695
        %v1083 = vpow.pop %v1082
        %v1084 = vmul.f32 %v1075, 1.442695
        %v1085 = vpow.pop %v1084
        %v1086 = vmul.f32 %v1076, 1.442695
        %v1087 = vpow.pop %v1086
        %v1088 = vmul.f32 %v1077, 1.442695
        %v1089 = vpow.pop %v1088
        %v1090 = vmul.f32 %v1078, 1.442695
        %v1091 = vpow.pop %v1090
        %v1092 = vmul.f32 %v1079, 1.442695
        %v1093 = vpow.pop %v1092
        %v1094 = vmul.f32 %v1080, 1.442695
        %v1095 = vpow.pop %v1094
        %v1096 = vmul.f32 %v1081, 1.442695
        %v1097 = vpow.pop %v1096
        %v1098 = vadd.f32 %v1083, 1.0
        %v1099 = vadd.f32 %v1085, 1.0
        %v1100 = vadd.f32 %v1087, 1.0
        %v1101 = vadd.f32 %v1089, 1.0
        %v1102 = vadd.f32 %v1091, 1.0
        %v1103 = vadd.f32 %v1093, 1.0
        %v1104 = vadd.f32 %v1095, 1.0
        %v1105 = vadd.f32 %v1097, 1.0
        %v1106 = vrcp.pop %v1098
        %v1107 = vmul.f32 %v1098, %v1106
        %v1108 = vsub.f32 1.0, %v1107
        %v1109 = vmul.f32 %v1106, %v1108
        %v1110 = vadd.f32 %v1106, %v1109
        %vm1111 = vweird.f32 %v1098
        %vm1112 = vweird.f32 %v1106
        %vm1113 = vmor %vm1111, %vm1112
        %v1114 = vsel %vm1113, %v1106, %v1110
        %v1115 = vand.u32 2147483647, %v1098
        %vm1116 = vcmp.eq.f32.partialorder %v1115, 8.507059e+37
        %v1117 = vand.u32 %v1098, 2147483648
        %v1118 = vor.u32 1.1754944e-38, %v1117
        %v1119 = vsel %vm1116, %v1118, %v1114
        %v1120 = vmul.f32 1.0, %v1119
        %v1121 = vrcp.pop %v1099
        %v1122 = vmul.f32 %v1099, %v1121
        %v1123 = vsub.f32 1.0, %v1122
        %v1124 = vmul.f32 %v1121, %v1123
        %v1125 = vadd.f32 %v1121, %v1124
        %vm1126 = vweird.f32 %v1099
        %vm1127 = vweird.f32 %v1121
        %vm1128 = vmor %vm1126, %vm1127
        %v1129 = vsel %vm1128, %v1121, %v1125
        %v1130 = vand.u32 2147483647, %v1099
        %vm1131 = vcmp.eq.f32.partialorder %v1130, 8.507059e+37
        %v1132 = vand.u32 %v1099, 2147483648
        %v1133 = vor.u32 1.1754944e-38, %v1132
        %v1134 = vsel %vm1131, %v1133, %v1129
        %v1135 = vmul.f32 1.0, %v1134
        %v1136 = vrcp.pop %v1100
        %v1137 = vmul.f32 %v1100, %v1136
        %v1138 = vsub.f32 1.0, %v1137
        %v1139 = vmul.f32 %v1136, %v1138
        %v1140 = vadd.f32 %v1136, %v1139
        %vm1141 = vweird.f32 %v1100
        %vm1142 = vweird.f32 %v1136
        %vm1143 = vmor %vm1141, %vm1142
        %v1144 = vsel %vm1143, %v1136, %v1140
        %v1145 = vand.u32 2147483647, %v1100
        %vm1146 = vcmp.eq.f32.partialorder %v1145, 8.507059e+37
        %v1147 = vand.u32 %v1100, 2147483648
        %v1148 = vor.u32 1.1754944e-38, %v1147
        %v1149 = vsel %vm1146, %v1148, %v1144
        %v1150 = vmul.f32 1.0, %v1149
        %v1151 = vrcp.pop %v1101
        %v1152 = vmul.f32 %v1101, %v1151
        %v1153 = vsub.f32 1.0, %v1152
        %v1154 = vmul.f32 %v1151, %v1153
        %v1155 = vadd.f32 %v1151, %v1154
        %vm1156 = vweird.f32 %v1101
        %vm1157 = vweird.f32 %v1151
        %vm1158 = vmor %vm1156, %vm1157
        %v1159 = vsel %vm1158, %v1151, %v1155
        %v1160 = vand.u32 2147483647, %v1101
        %vm1161 = vcmp.eq.f32.partialorder %v1160, 8.507059e+37
        %v1162 = vand.u32 %v1101, 2147483648
        %v1163 = vor.u32 1.1754944e-38, %v1162
        %v1164 = vsel %vm1161, %v1163, %v1159
        %v1165 = vmul.f32 1.0, %v1164
        %v1166 = vrcp.pop %v1102
        %v1167 = vmul.f32 %v1102, %v1166
        %v1168 = vsub.f32 1.0, %v1167
        %v1169 = vmul.f32 %v1166, %v1168
        %v1170 = vadd.f32 %v1166, %v1169
        %vm1171 = vweird.f32 %v1102
        %vm1172 = vweird.f32 %v1166
        %vm1173 = vmor %vm1171, %vm1172
        %v1174 = vsel %vm1173, %v1166, %v1170
        %v1175 = vand.u32 2147483647, %v1102
        %vm1176 = vcmp.eq.f32.partialorder %v1175, 8.507059e+37
        %v1177 = vand.u32 %v1102, 2147483648
        %v1178 = vor.u32 1.1754944e-38, %v1177
        %v1179 = vsel %vm1176, %v1178, %v1174
        %v1180 = vmul.f32 1.0, %v1179
        %v1181 = vrcp.pop %v1103
        %v1182 = vmul.f32 %v1103, %v1181
        %v1183 = vsub.f32 1.0, %v1182
        %v1184 = vmul.f32 %v1181, %v1183
        %v1185 = vadd.f32 %v1181, %v1184
        %vm1186 = vweird.f32 %v1103
        %vm1187 = vweird.f32 %v1181
        %vm1188 = vmor %vm1186, %vm1187
        %v1189 = vsel %vm1188, %v1181, %v1185
        %v1190 = vand.u32 2147483647, %v1103
        %vm1191 = vcmp.eq.f32.partialorder %v1190, 8.507059e+37
        %v1192 = vand.u32 %v1103, 2147483648
        %v1193 = vor.u32 1.1754944e-38, %v1192
        %v1194 = vsel %vm1191, %v1193, %v1189
        %v1195 = vmul.f32 1.0, %v1194
        %v1196 = vrcp.pop %v1104
        %v1197 = vmul.f32 %v1104, %v1196
        %v1198 = vsub.f32 1.0, %v1197
        %v1199 = vmul.f32 %v1196, %v1198
        %v1200 = vadd.f32 %v1196, %v1199
        %vm1201 = vweird.f32 %v1104
        %vm1202 = vweird.f32 %v1196
        %vm1203 = vmor %vm1201, %vm1202
        %v1204 = vsel %vm1203, %v1196, %v1200
        %v1205 = vand.u32 2147483647, %v1104
        %vm1206 = vcmp.eq.f32.partialorder %v1205, 8.507059e+37
        %v1207 = vand.u32 %v1104, 2147483648
        %v1208 = vor.u32 1.1754944e-38, %v1207
        %v1209 = vsel %vm1206, %v1208, %v1204
        %v1210 = vmul.f32 1.0, %v1209
        %v1211 = vrcp.pop %v1105
        %v1212 = vmul.f32 %v1105, %v1211
        %v1213 = vsub.f32 1.0, %v1212
        %v1214 = vmul.f32 %v1211, %v1213
        %v1215 = vadd.f32 %v1211, %v1214
        %vm1216 = vweird.f32 %v1105
        %vm1217 = vweird.f32 %v1211
        %vm1218 = vmor %vm1216, %vm1217
        %v1219 = vsel %vm1218, %v1211, %v1215
        %v1220 = vand.u32 2147483647, %v1105
        %vm1221 = vcmp.eq.f32.partialorder %v1220, 8.507059e+37
        %v1222 = vand.u32 %v1105, 2147483648
        %v1223 = vor.u32 1.1754944e-38, %v1222
        %v1224 = vsel %vm1221, %v1223, %v1219
        %v1225 = vmul.f32 1.0, %v1224
        %1234 = vrot.lane.b32.xlu0 %v1043, 64
        %v1235 = vpop.permute.xlu0 %1234
        %1236 = vrot.lane.b32.xlu0 %v1046, 64
        %v1237 = vpop.permute.xlu0 %1236
        %1238 = vrot.lane.b32.xlu0 %v1049, 64
        %v1239 = vpop.permute.xlu0 %1238
        %1240 = vrot.lane.b32.xlu0 %v1052, 64
        %v1241 = vpop.permute.xlu0 %1240
        %1242 = vrot.lane.b32.xlu0 %v1055, 64
        %v1243 = vpop.permute.xlu0 %1242
        %1244 = vrot.lane.b32.xlu0 %v1058, 64
        %v1245 = vpop.permute.xlu0 %1244
        %1246 = vrot.lane.b32.xlu0 %v1061, 64
        %v1247 = vpop.permute.xlu0 %1246
        %1248 = vrot.lane.b32.xlu0 %v1064, 64
        %v1249 = vpop.permute.xlu0 %1248
        %v1258 = vmul.f32 %v1120, %v1235
        %v1259 = vmul.f32 %v1135, %v1237
        %v1260 = vmul.f32 %v1150, %v1239
        %v1261 = vmul.f32 %v1165, %v1241
        %v1262 = vmul.f32 %v1180, %v1243
        %v1263 = vmul.f32 %v1195, %v1245
        %v1264 = vmul.f32 %v1210, %v1247
        %v1265 = vmul.f32 %v1225, %v1249
        %1274 = vrot.lane.b32.xlu0 %v1258, 64
        %v1275 = vpop.permute.xlu0 %1274
        %1276 = vrot.lane.b32.xlu0 %v1259, 64
        %v1277 = vpop.permute.xlu0 %1276
        %1278 = vrot.lane.b32.xlu0 %v1260, 64
        %v1279 = vpop.permute.xlu0 %1278
        %1280 = vrot.lane.b32.xlu0 %v1261, 64
        %v1281 = vpop.permute.xlu0 %1280
        %1282 = vrot.lane.b32.xlu0 %v1262, 64
        %v1283 = vpop.permute.xlu0 %1282
        %1284 = vrot.lane.b32.xlu0 %v1263, 64
        %v1285 = vpop.permute.xlu0 %1284
        %1286 = vrot.lane.b32.xlu0 %v1264, 64
        %v1287 = vpop.permute.xlu0 %1286
        %1288 = vrot.lane.b32.xlu0 %v1265, 64
        %v1289 = vpop.permute.xlu0 %1288
        %v1298 = vadd.f32 %v975, %v1275
        %v1299 = vadd.f32 %v978, %v1277
        %v1300 = vadd.f32 %v981, %v1279
        %v1301 = vadd.f32 %v984, %v1281
        %v1302 = vadd.f32 %v987, %v1283
        %v1303 = vadd.f32 %v990, %v1285
        %v1304 = vadd.f32 %v993, %v1287
        %v1305 = vadd.f32 %v996, %v1289
        %v1306 = vtanh.pop %v1298
        %v1307 = vtanh.pop %v1299
        %v1308 = vtanh.pop %v1300
        %v1309 = vtanh.pop %v1301
        %v1310 = vtanh.pop %v1302
        %v1311 = vtanh.pop %v1303
        %v1312 = vtanh.pop %v1304
        %v1313 = vtanh.pop %v1305
        %v1314 = vsub.f32 1.0, %v1120
        %v1315 = vsub.f32 1.0, %v1135
        %v1316 = vsub.f32 1.0, %v1150
        %v1317 = vsub.f32 1.0, %v1165
        %v1318 = vsub.f32 1.0, %v1180
        %v1319 = vsub.f32 1.0, %v1195
        %v1320 = vsub.f32 1.0, %v1210
        %v1321 = vsub.f32 1.0, %v1225
        %1330 = vrot.lane.b32.xlu0 %v1306, 96
        %v1331 = vpop.permute.xlu0 %1330
        %1332 = vrot.lane.b32.xlu0 %v1307, 96
        %v1333 = vpop.permute.xlu0 %1332
        %1334 = vrot.lane.b32.xlu0 %v1308, 96
        %v1335 = vpop.permute.xlu0 %1334
        %1336 = vrot.lane.b32.xlu0 %v1309, 96
        %v1337 = vpop.permute.xlu0 %1336
        %1338 = vrot.lane.b32.xlu0 %v1310, 96
        %v1339 = vpop.permute.xlu0 %1338
        %1340 = vrot.lane.b32.xlu0 %v1311, 96
        %v1341 = vpop.permute.xlu0 %1340
        %1342 = vrot.lane.b32.xlu0 %v1312, 96
        %v1343 = vpop.permute.xlu0 %1342
        %1344 = vrot.lane.b32.xlu0 %v1313, 96
        %v1345 = vpop.permute.xlu0 %1344
        %v1354 = vmul.f32 %v1314, %v1331
        %v1355 = vmul.f32 %v1315, %v1333
        %v1356 = vmul.f32 %v1316, %v1335
        %v1357 = vmul.f32 %v1317, %v1337
        %v1358 = vmul.f32 %v1318, %v1339
        %v1359 = vmul.f32 %v1319, %v1341
        %v1360 = vmul.f32 %v1320, %v1343
        %v1361 = vmul.f32 %v1321, %v1345
        %1362 = vrot.lane.b32.xlu0 %v896, 32
        %v1363 = vpop.permute.xlu0 %1362
        %1364 = vrot.lane.b32.xlu0 %v897, 32
        %v1365 = vpop.permute.xlu0 %1364
        %1366 = vrot.lane.b32.xlu0 %v898, 32
        %v1367 = vpop.permute.xlu0 %1366
        %1368 = vrot.lane.b32.xlu0 %v899, 32
        %v1369 = vpop.permute.xlu0 %1368
        %1370 = vrot.lane.b32.xlu0 %v900, 32
        %v1371 = vpop.permute.xlu0 %1370
        %1372 = vrot.lane.b32.xlu0 %v901, 32
        %v1373 = vpop.permute.xlu0 %1372
        %1374 = vrot.lane.b32.xlu0 %v902, 32
        %v1375 = vpop.permute.xlu0 %1374
        %1376 = vrot.lane.b32.xlu0 %v903, 32
        %v1377 = vpop.permute.xlu0 %1376
        %v1386 = vmul.f32 %v1120, %v1363
        %v1387 = vmul.f32 %v1135, %v1365
        %v1388 = vmul.f32 %v1150, %v1367
        %v1389 = vmul.f32 %v1165, %v1369
        %v1390 = vmul.f32 %v1180, %v1371
        %v1391 = vmul.f32 %v1195, %v1373
        %v1392 = vmul.f32 %v1210, %v1375
        %v1393 = vmul.f32 %v1225, %v1377
        %v1394 = vadd.f32 %v1354, %v1386
        %v1395 = vadd.f32 %v1355, %v1387
        %v1396 = vadd.f32 %v1356, %v1388
        %v1397 = vadd.f32 %v1357, %v1389
        %v1398 = vadd.f32 %v1358, %v1390
        %v1399 = vadd.f32 %v1359, %v1391
        %v1400 = vadd.f32 %v1360, %v1392
        %v1401 = vadd.f32 %v1361, %v1393
        %1410 = vrot.lane.b32.xlu0 %v1394, 96
        %v1411 = vpop.permute.xlu0 %1410
        %1412 = vrot.lane.b32.xlu0 %v1395, 96
        %v1413 = vpop.permute.xlu0 %1412
        %1414 = vrot.lane.b32.xlu0 %v1396, 96
        %v1415 = vpop.permute.xlu0 %1414
        %1416 = vrot.lane.b32.xlu0 %v1397, 96
        %v1417 = vpop.permute.xlu0 %1416
        %1418 = vrot.lane.b32.xlu0 %v1398, 96
        %v1419 = vpop.permute.xlu0 %1418
        %1420 = vrot.lane.b32.xlu0 %v1399, 96
        %v1421 = vpop.permute.xlu0 %1420
        %1422 = vrot.lane.b32.xlu0 %v1400, 96
        %v1423 = vpop.permute.xlu0 %1422
        %1424 = vrot.lane.b32.xlu0 %v1401, 96
        %v1425 = vpop.permute.xlu0 %1424
        %1434 = vst.msk [vmem:[#allocation3] sm:$0xff] %vm776, %v1411
        %1435 = vst.msk [vmem:[#allocation3 + $0x8] sm:$0xff] %vm776, %v1413
        %1436 = vst.msk [vmem:[#allocation3 + $0x10] sm:$0xff] %vm776, %v1415
        %1437 = vst.msk [vmem:[#allocation3 + $0x18] sm:$0xff] %vm776, %v1417
        %1438 = vst.msk [vmem:[#allocation3 + $0x20] sm:$0xff] %vm776, %v1419
        %1439 = vst.msk [vmem:[#allocation3 + $0x28] sm:$0xff] %vm776, %v1421
        %1440 = vst.msk [vmem:[#allocation3 + $0x30] sm:$0xff] %vm776, %v1423
        %1441 = vst.msk [vmem:[#allocation3 + $0x38] sm:$0xff] %vm776, %v1425
        %v1442 = vld [vmem:[%s724] sm:$0xff]
        %v1443 = vld [vmem:[%s724 + $0x8] sm:$0xff]
        %v1444 = vld [vmem:[%s724 + $0x10] sm:$0xff]
        %v1445 = vld [vmem:[%s724 + $0x18] sm:$0xff]
        %v1446 = vld [vmem:[%s724 + $0x20] sm:$0xff]
        %v1447 = vld [vmem:[%s724 + $0x28] sm:$0xff]
        %v1448 = vld [vmem:[%s724 + $0x30] sm:$0xff]
        %v1449 = vld [vmem:[%s724 + $0x38] sm:$0xff]
        %1451 = vset.pattern.permute.xlu0 0
        %1452 = vperm.xlu0 %1451, %v1442
        %v1453 = vpop.permute.xlu0 %1452
        %1456 = vset.pattern.permute.xlu0 0
        %1457 = vperm.xlu0 %1456, %v1443
        %v1458 = vpop.permute.xlu0 %1457
        %1461 = vset.pattern.permute.xlu0 0
        %1462 = vperm.xlu0 %1461, %v1444
        %v1463 = vpop.permute.xlu0 %1462
        %1466 = vset.pattern.permute.xlu0 0
        %1467 = vperm.xlu0 %1466, %v1445
        %v1468 = vpop.permute.xlu0 %1467
        %1471 = vset.pattern.permute.xlu0 0
        %1472 = vperm.xlu0 %1471, %v1446
        %v1473 = vpop.permute.xlu0 %1472
        %1476 = vset.pattern.permute.xlu0 0
        %1477 = vperm.xlu0 %1476, %v1447
        %v1478 = vpop.permute.xlu0 %1477
        %1481 = vset.pattern.permute.xlu0 0
        %1482 = vperm.xlu0 %1481, %v1448
        %v1483 = vpop.permute.xlu0 %1482
        %1486 = vset.pattern.permute.xlu0 0
        %1487 = vperm.xlu0 %1486, %v1449
        %v1488 = vpop.permute.xlu0 %1487
        %v1490 = vmul.f32 %v1394, %v1453
        %v1491 = vmul.f32 %v1395, %v1458
        %v1492 = vmul.f32 %v1396, %v1463
        %v1493 = vmul.f32 %v1397, %v1468
        %v1494 = vmul.f32 %v1398, %v1473
        %v1495 = vmul.f32 %v1399, %v1478
        %v1496 = vmul.f32 %v1400, %v1483
        %v1497 = vmul.f32 %v1401, %v1488
        %v1498 = vmax.f32 %v1490, %v1491
        %v1499 = vmax.f32 %v1498, %v1492
        %v1500 = vmax.f32 %v1499, %v1493
        %v1501 = vmax.f32 %v1500, %v1494
        %v1502 = vmax.f32 %v1501, %v1495
        %v1503 = vmax.f32 %v1502, %v1496
        %v1504 = vmax.f32 %v1503, %v1497
        %1506 = vrot.lane.b32.xlu0 %v1504, 96
        %v1507 = vpop.permute.xlu0 %1506
        %1509 = vst.msk [vmem:[#allocation4] sm:$0xff] %vm776, %v1507
        %p1510 = scmp.eq.s32.totalorder %s45, 2
        // Predicated region
        $region89: #{evmp_multilayer_forward.1} parent=67 // pred_check
          %p1511 = pneg %p1510
        $region90: #{evmp_multilayer_forward.1} parent=67 // pred_check_branch
          %1513 = sbr.rel (%p1511) target = $region92
        $region91: #{evmp_multilayer_forward.1} parent=67 // pred_region
          %1522 = vrot.lane.b32.xlu0 %v1490, 96
          %v1523 = vpop.permute.xlu0 %1522
          %1524 = vrot.lane.b32.xlu0 %v1491, 96
          %v1525 = vpop.permute.xlu0 %1524
          %1526 = vrot.lane.b32.xlu0 %v1492, 96
          %v1527 = vpop.permute.xlu0 %1526
          %1528 = vrot.lane.b32.xlu0 %v1493, 96
          %v1529 = vpop.permute.xlu0 %1528
          %1530 = vrot.lane.b32.xlu0 %v1494, 96
          %v1531 = vpop.permute.xlu0 %1530
          %1532 = vrot.lane.b32.xlu0 %v1495, 96
          %v1533 = vpop.permute.xlu0 %1532
          %1534 = vrot.lane.b32.xlu0 %v1496, 96
          %v1535 = vpop.permute.xlu0 %1534
          %1536 = vrot.lane.b32.xlu0 %v1497, 96
          %v1537 = vpop.permute.xlu0 %1536
          %1546 = vst.msk [vmem:[%s699] sm:$0xff] %vm776, %v1523
          %1547 = vst.msk [vmem:[%s699 + $0x8] sm:$0xff] %vm776, %v1525
          %1548 = vst.msk [vmem:[%s699 + $0x10] sm:$0xff] %vm776, %v1527
          %1549 = vst.msk [vmem:[%s699 + $0x18] sm:$0xff] %vm776, %v1529
          %1550 = vst.msk [vmem:[%s699 + $0x20] sm:$0xff] %vm776, %v1531
          %1551 = vst.msk [vmem:[%s699 + $0x28] sm:$0xff] %vm776, %v1533
          %1552 = vst.msk [vmem:[%s699 + $0x30] sm:$0xff] %vm776, %v1535
          %1553 = vst.msk [vmem:[%s699 + $0x38] sm:$0xff] %vm776, %v1537
          %1555 = vrot.lane.b32.xlu0 %v879, 96
          %v1556 = vpop.permute.xlu0 %1555
          %1558 = vst.msk [vmem:[%s706] sm:$0xff] %vm776, %v1556
        $region92: #{evmp_multilayer_forward.1} parent=67 // pred_fallthru
          _
        %s1559 = sand.u32 %s372, 1
        %s1560 = scalar_lea.sflag [#allocation7], %s1559
        %s1561 = sand.u32 %s372, 1
        %s1562 = smul.addr %s1561, 64
        %s1563 = scalar_lea.vmem [#allocation13], %s1562
        %s1564 = sand.u32 %s398, 1
        %s1565 = scalar_lea.sflag [#allocation15], %s1564
        %s1566 = sand.u32 %s398, 1
        %s1567 = smul.addr %s1566, 8
        %s1568 = scalar_lea.vmem [#allocation14], %s1567
        // Predicated region
        $region93: #{evmp_multilayer_forward.1} parent=67 // pred_check
          %p1569 = pneg %p382
        $region94: #{evmp_multilayer_forward.1} parent=67 // pred_check_branch
          %1571 = sbr.rel (%p1569) target = $region96
        $region95: #{evmp_multilayer_forward.1} parent=67 // pred_region
          %1573 = vsyncadd %s1560, 0
          %s1574 = smul.addr %s44, 8
          %s1575 = smul.addr %s1574, 8
          %s1576 = scalar_lea.hbm %s12, %s1575
          %s1577 = sshll.u32 %s1563, 4
          %s1578 = int_to_ptr.vmem [resolvable:$true] %s1577
          %s1579 = sshll.u32 %s1576, 4
          %s1580 = int_to_ptr.hbm [resolvable:$true] %s1579
          %1585 = dma.vmem_to_hbm [thread:$0]  %s1578, 1024, %s1580, %s1560, 128, 128, 8
        $region96: #{evmp_multilayer_forward.1} parent=67 // pred_fallthru
          _
        // Predicated region
        $region97: #{evmp_multilayer_forward.1} parent=67 // pred_check
          %p1586 = pneg %p408
        $region98: #{evmp_multilayer_forward.1} parent=67 // pred_check_branch
          %1588 = sbr.rel (%p1586) target = $region100
        $region99: #{evmp_multilayer_forward.1} parent=67 // pred_region
          %1590 = vsyncadd %s1565, 0
          %s1591 = smul.addr %s44, 8
          %s1592 = scalar_lea.hbm %s13, %s1591
          %s1594 = sshll.u32 %s1568, 4
          %s1595 = int_to_ptr.vmem [resolvable:$true] %s1594
          %s1596 = sshll.u32 %s1592, 4
          %s1597 = int_to_ptr.hbm [resolvable:$true] %s1596
          %1599 = dma.vmem_to_hbm [thread:$0]  %s1595, 128, %s1597, %s1565
        $region100: #{evmp_multilayer_forward.1} parent=67 // pred_fallthru
          _
      $region68: #{evmp_multilayer_forward.1} parent=5 // pred_fallthru
        _
      %p1600 = scmp.le.s32.totalorder 2, %s35
      // Predicated region
      $region101: #{evmp_multilayer_forward.1} parent=5 // pred_check
        %p1601 = pneg %p1600
      $region102: #{evmp_multilayer_forward.1} parent=5 // pred_check_branch
        %1603 = sbr.rel (%p1601) target = $region104
      $region103: #{evmp_multilayer_forward.1} parent=5 // pred_region
        %s1604 = ssub.s32 %s35, 2
        // Predicated region
        $region105: #{evmp_multilayer_forward.1} parent=103 // pred_check
          %p1605 = pneg %p388
        $region106: #{evmp_multilayer_forward.1} parent=103 // pred_check_branch
          %1607 = sbr.rel (%p1605) target = $region108
        $region107: #{evmp_multilayer_forward.1} parent=103 // pred_region
          %s1608 = sand.u32 %s373, 1
          %s1609 = scalar_lea.sflag [#allocation7], %s1608
          %s1610 = sand.u32 %s373, 1
          %s1611 = smul.addr %s1610, 64
          %s1612 = scalar_lea.vmem [#allocation13], %s1611
          %1614 = dma.done %s1609, 1024
        $region108: #{evmp_multilayer_forward.1} parent=103 // pred_fallthru
          _
        // Predicated region
        $region109: #{evmp_multilayer_forward.1} parent=103 // pred_check
          %p1615 = pneg %p414
        $region110: #{evmp_multilayer_forward.1} parent=103 // pred_check_branch
          %1617 = sbr.rel (%p1615) target = $region112
        $region111: #{evmp_multilayer_forward.1} parent=103 // pred_region
          %s1618 = sand.u32 %s399, 1
          %s1619 = scalar_lea.sflag [#allocation15], %s1618
          %s1620 = sand.u32 %s399, 1
          %s1621 = smul.addr %s1620, 8
          %s1622 = scalar_lea.vmem [#allocation14], %s1621
          %1624 = dma.done %s1619, 128
        $region112: #{evmp_multilayer_forward.1} parent=103 // pred_fallthru
          _
      $region104: #{evmp_multilayer_forward.1} parent=5 // pred_fallthru
        _
    $region6: #{evmp_multilayer_forward.1} parent=1 // loop_footer
      %s39 = sadd.s32 1, %s35
    $region7: #{evmp_multilayer_forward.1} parent=1 // loop_footer_branch
      %34 = sbr.rel target = $region3
    $region8: #{evmp_multilayer_forward.1} parent=1 // loop_exit
      _
    %1625 = vsyncpa [#allocation6], 1
    %s1626 = scalar_lea.sflag [#allocation6], 1
    %1627 = vsyncpa %s1626, 1
    %1628 = vsyncpa [#allocation9], 1
    %s1629 = scalar_lea.sflag [#allocation9], 1
    %1630 = vsyncpa %s1629, 1
    %1631 = vsyncpa [#allocation12], 1
    %s1632 = scalar_lea.sflag [#allocation12], 1
    %1633 = vsyncpa %s1632, 1
    %1634 = vsyncpa [#allocation7], 1
    %s1635 = scalar_lea.sflag [#allocation7], 1
    %1636 = vsyncpa %s1635, 1
    %1637 = vsyncpa [#allocation15], 1
    %s1638 = scalar_lea.sflag [#allocation15], 1
    %1639 = vsyncpa %s1638, 1

</llo_original>
